<compile_context>
chip_gen: v6e
topology: v6e:2x2x1
jax: 0.10.0
libtpu: 0.0.40
codegen_flags: <defaults>
</compile_context>

<pallas_src>
import functools

import jax
import jax.numpy as jnp
from jax.experimental import pallas as pl
from jax.experimental.pallas import tpu as pltpu


# -----------------------------------------------------------------------------
# Kernel-side helpers
# -----------------------------------------------------------------------------
def _head_math(z, w1, w2, b2):
    """h = LeakyReLU(z @ W1, 0.01); p = h @ W2 + b2   (f32 on the MXU)."""
    h = jnp.dot(z, w1, preferred_element_type=jnp.float32)
    h = jnp.where(h > 0, h, 0.01 * h)
    return jnp.dot(h, w2, preferred_element_type=jnp.float32) + b2


def _fold_reduce(s, c, fold):
    """s: (bt, fold*c) lane-folded sums -> (bt, c)."""
    if fold == 1:
        return s
    out = s[:, :c]
    for i in range(1, fold):
        out = out + s[:, i * c:(i + 1) * c]
    return out


def _store_packed(out_ref, p, z, c):
    """Single lane-dense (1, bt, 2C) output block: p in lanes [0,C), z in [C,2C)."""
    out_ref[0, :, :c] = p.astype(out_ref.dtype)
    out_ref[0, :, c:] = z.astype(out_ref.dtype)


# -----------------------------------------------------------------------------
# Pallas kernels: fused global-avg-pool + flatten + predictor MLP
#   z = mean_{spatial}(x) ; p = LeakyReLU(z @ W1) @ W2 + b2 ; out = [p | z]
# -----------------------------------------------------------------------------
def _pool_pred_fast_kernel(x_ref, w1_ref, w2_ref, b2_ref, out_ref, *,
                           inv_s, c, fold):
    # Single-shot path (whole folded spatial extent in one tile): no scratch,
    # no pl.when -> shortest possible critical path per launch.
    x = x_ref[...].astype(jnp.float32)                 # (bt, Sf, Cf) bf16 -> f32
    s = jnp.sum(x, axis=1)                             # (bt, Cf)
    z = _fold_reduce(s, c, fold) * inv_s               # (bt, C) pooled mean
    p = _head_math(z, w1_ref[...], w2_ref[...], b2_ref[...])
    _store_packed(out_ref, p, z, c)


def _pool_pred_tiled_kernel(x_ref, w1_ref, w2_ref, b2_ref, out_ref, acc_ref, *,
                            inv_s, c, fold):
    k = pl.program_id(1)                               # reduction (spatial) axis

    @pl.when(k == 0)
    def _init():
        acc_ref[...] = jnp.zeros_like(acc_ref)

    # Sublane-aligned partial sums: the steady state is whole-vreg VPU adds
    # only; the single 8-sublane XLU reduce is deferred to finalize.
    x = x_ref[...].astype(jnp.float32)                 # (bt, ts, Cf)
    bt, ts, cf = x.shape
    acc_ref[...] += jnp.sum(x.reshape(bt, ts // 8, 8, cf), axis=1)   # (bt,8,Cf)

    @pl.when(k == pl.num_programs(1) - 1)
    def _finalize():
        s = jnp.sum(acc_ref[...], axis=1)              # (bt, Cf), one XLU reduce
        z = _fold_reduce(s, c, fold) * inv_s
        p = _head_math(z, w1_ref[...], w2_ref[...], b2_ref[...])
        _store_packed(out_ref, p, z, c)


# -----------------------------------------------------------------------------
# Tiling / VMEM planning (generation aware)
# -----------------------------------------------------------------------------
def _vmem_plan():
    """Return (vmem_limit_bytes, per-input-buffer byte budget)."""
    cap = 64 << 20                                     # conservative fallback (v7x)
    try:
        cap = int(pltpu.get_tpu_info().vmem_capacity_bytes)
    except Exception:
        pass
    # v5e/v6e (128 MiB physical) -> 96 MiB scoped; v7x (64 MiB/TC) -> 48 MiB.
    vmem_limit = min((cap * 3) // 4, 96 << 20)
    # Input tiles are double-buffered; reserve ~8 MiB for weights/outputs/
    # scratch/compiler-internal.
    per_buf = max(2 << 20, (vmem_limit - (8 << 20)) // 2)
    return vmem_limit, per_buf


def _choose_batch_tile(b_total, max_bt=256):
    """Largest divisor of b_total <= max_bt that still leaves >=2 blocks when
    possible (keeps both v7x TensorCores fed, bounds per-block VMEM)."""
    if b_total <= 1:
        return max(b_total, 1)
    target = min(max_bt, max(1, b_total // 2))
    for bt in range(target, 0, -1):
        if b_total % bt == 0:
            return bt
    return b_total


def _choose_spatial_tile(s, bt, c, itemsize, budget_bytes):
    """Largest multiple of 8 dividing s whose (bt, ts, c) tile fits the budget."""
    cap = max(8, budget_bytes // max(1, bt * c * itemsize))
    if cap >= s:
        return s
    ts = (min(cap, s) // 8) * 8
    while ts >= 8:
        if s % ts == 0:
            return ts
        ts -= 8
    return s  # fallback: single block along s


# -----------------------------------------------------------------------------
# Wrapper
# -----------------------------------------------------------------------------
def pool_predict(x_bsc, w1, w2, b2, *, spatial_tile=None, batch_tile=None):
    """x_bsc: (Btot, S, C) features (both views concatenated along batch).
    Fused AdaptiveAvgPool2d((1,1)) + flatten + predictor MLP.
    Returns (p, z), each (Btot, C) float32."""
    b_total, s_orig, c = x_bsc.shape
    inv_s = 1.0 / s_orig

    # Lane-fold small-C feature maps so every streamed / accumulated vreg row
    # is 128 lanes dense (C=64 -> (S/2, 128)); unfolded once at finalize.
    fold = 1
    if c < 128 and 128 % c == 0 and s_orig % (128 // c) == 0:
        fold = 128 // c
    s_f, c_f = s_orig // fold, c * fold

    # Stream the feature map as bf16 (halves HBM bytes); accumulate in f32.
    x_bsc = x_bsc.reshape(b_total, s_f, c_f).astype(jnp.bfloat16)

    bt = batch_tile if batch_tile is not None else _choose_batch_tile(b_total)
    assert b_total % bt == 0
    n_b = b_total // bt

    vmem_limit, per_buf = _vmem_plan()
    if spatial_tile is None:
        spatial_tile = _choose_spatial_tile(s_f, bt, c_f, itemsize=2,
                                            budget_bytes=per_buf)
    assert s_f % spatial_tile == 0
    n_k = s_f // spatial_tile

    w1 = w1.astype(jnp.float32)
    w2 = w2.astype(jnp.float32)
    b2 = b2.reshape(1, c).astype(jnp.float32)

    out_shape = jax.ShapeDtypeStruct((n_b, bt, 2 * c), jnp.float32)

    if n_k == 1:
        kernel = functools.partial(_pool_pred_fast_kernel,
                                   inv_s=inv_s, c=c, fold=fold)
        grid = (n_b,)
        in_specs = [
            pl.BlockSpec((bt, s_f, c_f), lambda b: (b, 0, 0)),
            pl.BlockSpec((c, c), lambda b: (0, 0)),
            pl.BlockSpec((c, c), lambda b: (0, 0)),
            pl.BlockSpec((1, c), lambda b: (0, 0)),
        ]
        out_specs = pl.BlockSpec((1, bt, 2 * c), lambda b: (b, 0, 0))
        scratch_shapes = []
        dims = ("parallel",)
    else:
        assert spatial_tile % 8 == 0, "tiled reduction needs sublane-aligned tiles"
        kernel = functools.partial(_pool_pred_tiled_kernel,
                                   inv_s=inv_s, c=c, fold=fold)
        grid = (n_b, n_k)
        in_specs = [
            pl.BlockSpec((bt, spatial_tile, c_f), lambda b, k: (b, k, 0)),
            pl.BlockSpec((c, c), lambda b, k: (0, 0)),
            pl.BlockSpec((c, c), lambda b, k: (0, 0)),
            pl.BlockSpec((1, c), lambda b, k: (0, 0)),
        ]
        out_specs = pl.BlockSpec((1, bt, 2 * c), lambda b, k: (b, 0, 0))
        scratch_shapes = [pltpu.VMEM((bt, 8, c_f), jnp.float32)]
        dims = ("parallel", "arbitrary")

    out = pl.pallas_call(
        kernel,
        out_shape=out_shape,
        grid_spec=pltpu.PrefetchScalarGridSpec(
            num_scalar_prefetch=0,
            grid=grid,
            in_specs=in_specs,
            out_specs=out_specs,
            scratch_shapes=scratch_shapes,
        ),
        compiler_params=pltpu.CompilerParams(
            dimension_semantics=dims,
            vmem_limit_bytes=int(vmem_limit)),
    )(x_bsc, w1, w2, b2)

    out = out.reshape(b_total, 2 * c)
    return out[:, :c], out[:, c:]


# -----------------------------------------------------------------------------
# Deterministic stand-in encoder (plain JAX glue): produces three feature maps
# with channels (64, 128, 256) at decreasing spatial resolution, NCHW in.
# -----------------------------------------------------------------------------
def encoder_stub(x_nchw, text, enc_params):
    x = jnp.transpose(x_nchw, (0, 2, 3, 1))            # NCHW -> NHWC
    t = jnp.mean(text, axis=1)                         # (B, d_text)
    feats = []
    for (w, tw) in enc_params:
        x = jnp.einsum('bhwc,cd->bhwd', x, w)
        x = x + jnp.einsum('bt,td->bd', t, tw)[:, None, None, :]
        x = jax.nn.relu(x)
        feats.append(x)
        b, h, wd, c = x.shape
        x = x.reshape(b, h // 2, 2, wd // 2, 2, c).mean(axis=(2, 4))  # 2x2 pool
    return feats                                       # NHWC, channels 64/128/256


# -----------------------------------------------------------------------------
# Parameter construction (deterministic, in-script)
# -----------------------------------------------------------------------------
def make_params(key, d_text=32):
    stage_dims = [(3, 64), (64, 128), (128, 256)]
    enc_params, pred_params = [], []
    for (cin, cout) in stage_dims:
        key, k1, k2 = jax.random.split(key, 3)
        w = jax.random.normal(k1, (cin, cout), jnp.float32) * (1.0 / jnp.sqrt(cin))
        tw = jax.random.normal(k2, (d_text, cout), jnp.float32) * (1.0 / jnp.sqrt(d_text))
        enc_params.append((w, tw))
    for c in (64, 128, 256):
        key, k1, k2, k3 = jax.random.split(key, 4)
        w1 = jax.random.normal(k1, (c, c), jnp.float32) * (1.0 / jnp.sqrt(c))
        w2 = jax.random.normal(k2, (c, c), jnp.float32) * (1.0 / jnp.sqrt(c))
        b2 = jax.random.normal(k3, (c,), jnp.float32) * 0.01
        pred_params.append((w1, w2, b2))
    return enc_params, pred_params


# -----------------------------------------------------------------------------
# SimSiam forward
# -----------------------------------------------------------------------------
@jax.jit
def simsiam_forward(x1, x2, text, enc_params, pred_params):
    B = x1.shape[0]
    # Concatenate the two views once at the image level: one encoder pass and
    # no per-scale feature-map concat copies.
    x = jnp.concatenate([x1, x2], axis=0)              # (2B, C, H, W)
    t = jnp.concatenate([text, text], axis=0)
    feats = encoder_stub(x, t, enc_params)             # [(2B,H,W,64/128/256)]

    ps1, ps2, zs1, zs2 = [], [], [], []
    for scale in range(3):
        w1, w2, b2 = pred_params[scale]
        f = feats[scale]
        bt, h, wd, c = f.shape
        p, z = pool_predict(f.reshape(bt, h * wd, c), w1, w2, b2)
        ps1.append(p[:B]); ps2.append(p[B:])
        zs1.append(jax.lax.stop_gradient(z[:B]))       # .detach()
        zs2.append(jax.lax.stop_gradient(z[B:]))

    # (p1_1, p1_2, p1_3, p2_1, p2_2, p2_3, x1_1, x1_2, x1_3, x2_1, x2_2, x2_3)
    return tuple(ps1 + ps2 + zs1 + zs2)


def head_reference(x_bsc, w1, w2, b2):
    """Plain-JAX reference mirroring the kernel math (bf16-streamed input,
    f32 pooling, f32 predictor matmuls)."""
    xq = x_bsc.astype(jnp.bfloat16).astype(jnp.float32)
    z = jnp.mean(xq, axis=1)
    h = z @ w1
    h = jnp.where(h > 0, h, 0.01 * h)
    p = h @ w2 + b2
    return p, z


if __name__ == "__main__":
    key = jax.random.PRNGKey(0)
    kx1, kx2, ktxt, kparam = jax.random.split(key, 4)

    B, c_in, h_in, w_in = 2, 3, 16, 16
    seq, d_text = 8, 32

    x1 = jax.random.normal(kx1, (B, c_in, h_in, w_in), jnp.float32)  # NCHW
    x2 = jax.random.normal(kx2, (B, c_in, h_in, w_in), jnp.float32)
    text = jax.random.normal(ktxt, (B, seq, d_text), jnp.float32)

    enc_params, pred_params = make_params(kparam, d_text=d_text)

    outs = simsiam_forward(x1, x2, text, enc_params, pred_params)
    outs = jax.block_until_ready(outs)

    expected_shapes = [(B, 64), (B, 128), (B, 256)] * 4
    assert len(outs) == 12
    for o, sh in zip(outs, expected_shapes):
        assert o.shape == sh, (o.shape, sh)
        assert bool(jnp.all(jnp.isfinite(o)))

    # Controlled kernel-vs-reference checks on bit-identical feature inputs:
    #   (scale 0, fast path)  - C=64, lane-folded, single-shot reduction
    #   (scale 0, tiled path) - same features, 4-step streamed reduction
    #   (scale 2, fast path)  - C=256, no fold
    feats_cat = encoder_stub(jnp.concatenate([x1, x2], axis=0),
                             jnp.concatenate([text, text], axis=0), enc_params)
    for scale, spatial_tile in ((0, None), (0, 32), (2, None)):
        f = feats_cat[scale]
        bt_, hh, ww, cc = f.shape
        feat = f.reshape(bt_, hh * ww, cc)
        w1, w2, b2 = pred_params[scale]
        p_k, z_k = pool_predict(feat, w1, w2, b2, spatial_tile=spatial_tile)
        p_k, z_k = jax.block_until_ready((p_k, z_k))
        p_r, z_r = head_reference(feat, w1, w2, b2)
        assert jnp.allclose(z_k, z_r, atol=1e-4, rtol=1e-4), (scale, spatial_tile)
        assert jnp.allclose(p_k, p_r, atol=2e-2, rtol=2e-2), (scale, spatial_tile)

    print("KERNEL_OK")
</pallas_src>

<mosaic_0001>
module attributes {stable_mosaic.version = 11 : i64} {
  func.func @_pool_pred_fast_kernel(%arg0: i32, %arg1: memref<2x16x256xbf16, #tpu.memory_space<vmem>>, %arg2: memref<256x256xf32, #tpu.memory_space<vmem>>, %arg3: memref<256x256xf32, #tpu.memory_space<vmem>>, %arg4: memref<1x256xf32, #tpu.memory_space<vmem>>, %arg5: memref<1x2x512xf32, #tpu.memory_space<vmem>>) attributes {dimension_semantics = [#tpu.dimension_semantics<parallel>], iteration_bounds = array<i64: 2>, scalar_prefetch = 0 : i64, scratch_operands = 0 : i64, tpu.core_type = #tpu.core_type<tc>, window_params = [{transform_indices = @transform_0, window_bounds = array<i64: 2, 16, 256>}, {pipeline_mode = #tpu.pipeline_mode<synchronous>, transform_indices = @transform_1, window_bounds = array<i64: 256, 256>}, {pipeline_mode = #tpu.pipeline_mode<synchronous>, transform_indices = @transform_2, window_bounds = array<i64: 256, 256>}, {pipeline_mode = #tpu.pipeline_mode<synchronous>, transform_indices = @transform_3, window_bounds = array<i64: 1, 256>}, {transform_indices = @transform_4, window_bounds = array<i64: 1, 2, 512>}]} {
    %c0 = arith.constant 0 : index
    %c0_0 = arith.constant 0 : index
    %c0_1 = arith.constant 0 : index
    %0 = vector.load %arg1[%c0, %c0_0, %c0_1] : memref<2x16x256xbf16, #tpu.memory_space<vmem>>, vector<2x16x256xbf16>
    %1 = arith.extf %0 : vector<2x16x256xbf16> to vector<2x16x256xf32>
    %cst = arith.constant dense<0.000000e+00> : vector<2x256xf32>
    %2 = vector.multi_reduction <add>, %1, %cst [1] : vector<2x16x256xf32> to vector<2x256xf32>
    %cst_2 = arith.constant 6.250000e-02 : f32
    %3 = vector.broadcast %cst_2 : f32 to vector<2x256xf32>
    %4 = arith.mulf %2, %3 : vector<2x256xf32>
    %c0_3 = arith.constant 0 : index
    %c0_4 = arith.constant 0 : index
    %5 = vector.load %arg2[%c0_3, %c0_4] : memref<256x256xf32, #tpu.memory_space<vmem>>, vector<256x256xf32>
    %c0_5 = arith.constant 0 : index
    %c0_6 = arith.constant 0 : index
    %6 = vector.load %arg3[%c0_5, %c0_6] : memref<256x256xf32, #tpu.memory_space<vmem>>, vector<256x256xf32>
    %c0_7 = arith.constant 0 : index
    %c0_8 = arith.constant 0 : index
    %7 = vector.load %arg4[%c0_7, %c0_8] : memref<1x256xf32, #tpu.memory_space<vmem>>, vector<1x256xf32>
    %cst_9 = arith.constant dense<0.000000e+00> : vector<2x256xf32>
    %8 = tpu.matmul %4, %5, %cst_9 {dimension_numbers = #tpu.dot_dimension_numbers<[1], [0], [0], [1], [0, 0, 1, 1], [], []>} : vector<2x256xf32>, vector<256x256xf32>, vector<2x256xf32> -> vector<2x256xf32>
    %cst_10 = arith.constant 0.000000e+00 : f32
    %9 = vector.broadcast %cst_10 : f32 to vector<2x256xf32>
    %10 = arith.cmpf ogt, %8, %9 : vector<2x256xf32>
    %cst_11 = arith.constant 0.00999999977 : f32
    %11 = vector.broadcast %cst_11 : f32 to vector<2x256xf32>
    %12 = arith.mulf %11, %8 : vector<2x256xf32>
    %13 = arith.select %10, %8, %12 : vector<2x256xi1>, vector<2x256xf32>
    %cst_12 = arith.constant dense<0.000000e+00> : vector<2x256xf32>
    %14 = tpu.matmul %13, %6, %cst_12 {dimension_numbers = #tpu.dot_dimension_numbers<[1], [0], [0], [1], [0, 0, 1, 1], [], []>} : vector<2x256xf32>, vector<256x256xf32>, vector<2x256xf32> -> vector<2x256xf32>
    %15 = vector.broadcast %7 : vector<1x256xf32> to vector<2x256xf32>
    %16 = arith.addf %14, %15 : vector<2x256xf32>
    %c0_13 = arith.constant 0 : index
    %c0_14 = arith.constant 0 : index
    %c0_15 = arith.constant 0 : index
    %17 = vector.load %arg5[%c0_13, %c0_14, %c0_15] : memref<1x2x512xf32, #tpu.memory_space<vmem>>, vector<1x2x256xf32>
    %18 = vector.shape_cast %17 : vector<1x2x256xf32> to vector<2x256xf32>
    %19 = vector.shape_cast %16 : vector<2x256xf32> to vector<1x2x256xf32>
    tpu.vector_store %arg5[%c0_13, %c0_14, %c0_15], %19 {strides = array<i32>} : memref<1x2x512xf32, #tpu.memory_space<vmem>>, vector<1x2x256xf32>,
    %c0_16 = arith.constant 0 : index
    %c0_17 = arith.constant 0 : index
    %c256 = arith.constant 256 : index
    %20 = vector.load %arg5[%c0_16, %c0_17, %c256] : memref<1x2x512xf32, #tpu.memory_space<vmem>>, vector<1x2x256xf32>
    %21 = vector.shape_cast %20 : vector<1x2x256xf32> to vector<2x256xf32>
    %22 = vector.shape_cast %4 : vector<2x256xf32> to vector<1x2x256xf32>
    tpu.vector_store %arg5[%c0_16, %c0_17, %c256], %22 {strides = array<i32>} : memref<1x2x512xf32, #tpu.memory_space<vmem>>, vector<1x2x256xf32>,
    return
  }
  func.func @transform_0(%arg0: i32) -> (i32, i32, i32) {
    %c0_i32 = arith.constant 0 : i32
    %c0_i32_0 = arith.constant 0 : i32
    %c0_i32_1 = arith.constant 0 : i32
    return %arg0, %c0_i32, %c0_i32_0 : i32, i32, i32
  }
  func.func @transform_1(%arg0: i32) -> (i32, i32) {
    %c0_i32 = arith.constant 0 : i32
    %c0_i32_0 = arith.constant 0 : i32
    %c0_i32_1 = arith.constant 0 : i32
    return %c0_i32, %c0_i32_0 : i32, i32
  }
  func.func @transform_2(%arg0: i32) -> (i32, i32) {
    %c0_i32 = arith.constant 0 : i32
    %c0_i32_0 = arith.constant 0 : i32
    %c0_i32_1 = arith.constant 0 : i32
    return %c0_i32, %c0_i32_0 : i32, i32
  }
  func.func @transform_3(%arg0: i32) -> (i32, i32) {
    %c0_i32 = arith.constant 0 : i32
    %c0_i32_0 = arith.constant 0 : i32
    %c0_i32_1 = arith.constant 0 : i32
    return %c0_i32, %c0_i32_0 : i32, i32
  }
  func.func @transform_4(%arg0: i32) -> (i32, i32, i32) {
    %c0_i32 = arith.constant 0 : i32
    %c0_i32_0 = arith.constant 0 : i32
    %c0_i32_1 = arith.constant 0 : i32
    return %arg0, %c0_i32, %c0_i32_0 : i32, i32, i32
  }
}

module attributes {stable_mosaic.version = 11 : i64} {
  func.func @_pool_pred_fast_kernel(%arg0: i32, %arg1: memref<2x64x128xbf16, #tpu.memory_space<vmem>>, %arg2: memref<128x128xf32, #tpu.memory_space<vmem>>, %arg3: memref<128x128xf32, #tpu.memory_space<vmem>>, %arg4: memref<1x128xf32, #tpu.memory_space<vmem>>, %arg5: memref<1x2x256xf32, #tpu.memory_space<vmem>>) attributes {dimension_semantics = [#tpu.dimension_semantics<parallel>], iteration_bounds = array<i64: 2>, scalar_prefetch = 0 : i64, scratch_operands = 0 : i64, tpu.core_type = #tpu.core_type<tc>, window_params = [{transform_indices = @transform_0, window_bounds = array<i64: 2, 64, 128>}, {pipeline_mode = #tpu.pipeline_mode<synchronous>, transform_indices = @transform_1, window_bounds = array<i64: 128, 128>}, {pipeline_mode = #tpu.pipeline_mode<synchronous>, transform_indices = @transform_2, window_bounds = array<i64: 128, 128>}, {pipeline_mode = #tpu.pipeline_mode<synchronous>, transform_indices = @transform_3, window_bounds = array<i64: 1, 128>}, {transform_indices = @transform_4, window_bounds = array<i64: 1, 2, 256>}]} {
    %c0 = arith.constant 0 : index
    %c0_0 = arith.constant 0 : index
    %c0_1 = arith.constant 0 : index
    %0 = vector.load %arg1[%c0, %c0_0, %c0_1] : memref<2x64x128xbf16, #tpu.memory_space<vmem>>, vector<2x64x128xbf16>
    %1 = arith.extf %0 : vector<2x64x128xbf16> to vector<2x64x128xf32>
    %cst = arith.constant dense<0.000000e+00> : vector<2x128xf32>
    %2 = vector.multi_reduction <add>, %1, %cst [1] : vector<2x64x128xf32> to vector<2x128xf32>
    %cst_2 = arith.constant 1.562500e-02 : f32
    %3 = vector.broadcast %cst_2 : f32 to vector<2x128xf32>
    %4 = arith.mulf %2, %3 : vector<2x128xf32>
    %c0_3 = arith.constant 0 : index
    %c0_4 = arith.constant 0 : index
    %5 = vector.load %arg2[%c0_3, %c0_4] : memref<128x128xf32, #tpu.memory_space<vmem>>, vector<128x128xf32>
    %c0_5 = arith.constant 0 : index
    %c0_6 = arith.constant 0 : index
    %6 = vector.load %arg3[%c0_5, %c0_6] : memref<128x128xf32, #tpu.memory_space<vmem>>, vector<128x128xf32>
    %c0_7 = arith.constant 0 : index
    %c0_8 = arith.constant 0 : index
    %7 = vector.load %arg4[%c0_7, %c0_8] : memref<1x128xf32, #tpu.memory_space<vmem>>, vector<1x128xf32>
    %cst_9 = arith.constant dense<0.000000e+00> : vector<2x128xf32>
    %8 = tpu.matmul %4, %5, %cst_9 {dimension_numbers = #tpu.dot_dimension_numbers<[1], [0], [0], [1], [0, 0, 1, 1], [], []>} : vector<2x128xf32>, vector<128x128xf32>, vector<2x128xf32> -> vector<2x128xf32>
    %cst_10 = arith.constant 0.000000e+00 : f32
    %9 = vector.broadcast %cst_10 : f32 to vector<2x128xf32>
    %10 = arith.cmpf ogt, %8, %9 : vector<2x128xf32>
    %cst_11 = arith.constant 0.00999999977 : f32
    %11 = vector.broadcast %cst_11 : f32 to vector<2x128xf32>
    %12 = arith.mulf %11, %8 : vector<2x128xf32>
    %13 = arith.select %10, %8, %12 : vector<2x128xi1>, vector<2x128xf32>
    %cst_12 = arith.constant dense<0.000000e+00> : vector<2x128xf32>
    %14 = tpu.matmul %13, %6, %cst_12 {dimension_numbers = #tpu.dot_dimension_numbers<[1], [0], [0], [1], [0, 0, 1, 1], [], []>} : vector<2x128xf32>, vector<128x128xf32>, vector<2x128xf32> -> vector<2x128xf32>
    %15 = vector.broadcast %7 : vector<1x128xf32> to vector<2x128xf32>
    %16 = arith.addf %14, %15 : vector<2x128xf32>
    %c0_13 = arith.constant 0 : index
    %c0_14 = arith.constant 0 : index
    %c0_15 = arith.constant 0 : index
    %17 = vector.load %arg5[%c0_13, %c0_14, %c0_15] : memref<1x2x256xf32, #tpu.memory_space<vmem>>, vector<1x2x128xf32>
    %18 = vector.shape_cast %17 : vector<1x2x128xf32> to vector<2x128xf32>
    %19 = vector.shape_cast %16 : vector<2x128xf32> to vector<1x2x128xf32>
    tpu.vector_store %arg5[%c0_13, %c0_14, %c0_15], %19 {strides = array<i32>} : memref<1x2x256xf32, #tpu.memory_space<vmem>>, vector<1x2x128xf32>,
    %c0_16 = arith.constant 0 : index
    %c0_17 = arith.constant 0 : index
    %c128 = arith.constant 128 : index
    %20 = vector.load %arg5[%c0_16, %c0_17, %c128] : memref<1x2x256xf32, #tpu.memory_space<vmem>>, vector<1x2x128xf32>
    %21 = vector.shape_cast %20 : vector<1x2x128xf32> to vector<2x128xf32>
    %22 = vector.shape_cast %4 : vector<2x128xf32> to vector<1x2x128xf32>
    tpu.vector_store %arg5[%c0_16, %c0_17, %c128], %22 {strides = array<i32>} : memref<1x2x256xf32, #tpu.memory_space<vmem>>, vector<1x2x128xf32>,
    return
  }
  func.func @transform_0(%arg0: i32) -> (i32, i32, i32) {
    %c0_i32 = arith.constant 0 : i32
    %c0_i32_0 = arith.constant 0 : i32
    %c0_i32_1 = arith.constant 0 : i32
    return %arg0, %c0_i32, %c0_i32_0 : i32, i32, i32
  }
  func.func @transform_1(%arg0: i32) -> (i32, i32) {
    %c0_i32 = arith.constant 0 : i32
    %c0_i32_0 = arith.constant 0 : i32
    %c0_i32_1 = arith.constant 0 : i32
    return %c0_i32, %c0_i32_0 : i32, i32
  }
  func.func @transform_2(%arg0: i32) -> (i32, i32) {
    %c0_i32 = arith.constant 0 : i32
    %c0_i32_0 = arith.constant 0 : i32
    %c0_i32_1 = arith.constant 0 : i32
    return %c0_i32, %c0_i32_0 : i32, i32
  }
  func.func @transform_3(%arg0: i32) -> (i32, i32) {
    %c0_i32 = arith.constant 0 : i32
    %c0_i32_0 = arith.constant 0 : i32
    %c0_i32_1 = arith.constant 0 : i32
    return %c0_i32, %c0_i32_0 : i32, i32
  }
  func.func @transform_4(%arg0: i32) -> (i32, i32, i32) {
    %c0_i32 = arith.constant 0 : i32
    %c0_i32_0 = arith.constant 0 : i32
    %c0_i32_1 = arith.constant 0 : i32
    return %arg0, %c0_i32, %c0_i32_0 : i32, i32, i32
  }
}

module attributes {stable_mosaic.version = 11 : i64} {
  func.func @_pool_pred_fast_kernel(%arg0: i32, %arg1: memref<2x128x128xbf16, #tpu.memory_space<vmem>>, %arg2: memref<64x64xf32, #tpu.memory_space<vmem>>, %arg3: memref<64x64xf32, #tpu.memory_space<vmem>>, %arg4: memref<1x64xf32, #tpu.memory_space<vmem>>, %arg5: memref<1x2x128xf32, #tpu.memory_space<vmem>>) attributes {dimension_semantics = [#tpu.dimension_semantics<parallel>], iteration_bounds = array<i64: 2>, scalar_prefetch = 0 : i64, scratch_operands = 0 : i64, tpu.core_type = #tpu.core_type<tc>, window_params = [{transform_indices = @transform_0, window_bounds = array<i64: 2, 128, 128>}, {pipeline_mode = #tpu.pipeline_mode<synchronous>, transform_indices = @transform_1, window_bounds = array<i64: 64, 64>}, {pipeline_mode = #tpu.pipeline_mode<synchronous>, transform_indices = @transform_2, window_bounds = array<i64: 64, 64>}, {pipeline_mode = #tpu.pipeline_mode<synchronous>, transform_indices = @transform_3, window_bounds = array<i64: 1, 64>}, {transform_indices = @transform_4, window_bounds = array<i64: 1, 2, 128>}]} {
    %c0 = arith.constant 0 : index
    %c0_0 = arith.constant 0 : index
    %c0_1 = arith.constant 0 : index
    %0 = vector.load %arg1[%c0, %c0_0, %c0_1] : memref<2x128x128xbf16, #tpu.memory_space<vmem>>, vector<2x128x128xbf16>
    %1 = arith.extf %0 : vector<2x128x128xbf16> to vector<2x128x128xf32>
    %cst = arith.constant dense<0.000000e+00> : vector<2x128xf32>
    %2 = vector.multi_reduction <add>, %1, %cst [1] : vector<2x128x128xf32> to vector<2x128xf32>
    %3 = vector.extract_strided_slice %2 {offsets = [0, 0], sizes = [2, 64], strides = [1, 1]} : vector<2x128xf32> to vector<2x64xf32>
    %4 = vector.extract_strided_slice %2 {offsets = [0, 64], sizes = [2, 64], strides = [1, 1]} : vector<2x128xf32> to vector<2x64xf32>
    %5 = arith.addf %3, %4 : vector<2x64xf32>
    %cst_2 = arith.constant 3.906250e-03 : f32
    %6 = vector.broadcast %cst_2 : f32 to vector<2x64xf32>
    %7 = arith.mulf %5, %6 : vector<2x64xf32>
    %c0_3 = arith.constant 0 : index
    %c0_4 = arith.constant 0 : index
    %8 = vector.load %arg2[%c0_3, %c0_4] : memref<64x64xf32, #tpu.memory_space<vmem>>, vector<64x64xf32>
    %c0_5 = arith.constant 0 : index
    %c0_6 = arith.constant 0 : index
    %9 = vector.load %arg3[%c0_5, %c0_6] : memref<64x64xf32, #tpu.memory_space<vmem>>, vector<64x64xf32>
    %c0_7 = arith.constant 0 : index
    %c0_8 = arith.constant 0 : index
    %10 = vector.load %arg4[%c0_7, %c0_8] : memref<1x64xf32, #tpu.memory_space<vmem>>, vector<1x64xf32>
    %cst_9 = arith.constant dense<0.000000e+00> : vector<2x64xf32>
    %11 = tpu.matmul %7, %8, %cst_9 {dimension_numbers = #tpu.dot_dimension_numbers<[1], [0], [0], [1], [0, 0, 1, 1], [], []>} : vector<2x64xf32>, vector<64x64xf32>, vector<2x64xf32> -> vector<2x64xf32>
    %cst_10 = arith.constant 0.000000e+00 : f32
    %12 = vector.broadcast %cst_10 : f32 to vector<2x64xf32>
    %13 = arith.cmpf ogt, %11, %12 : vector<2x64xf32>
    %cst_11 = arith.constant 0.00999999977 : f32
    %14 = vector.broadcast %cst_11 : f32 to vector<2x64xf32>
    %15 = arith.mulf %14, %11 : vector<2x64xf32>
    %16 = arith.select %13, %11, %15 : vector<2x64xi1>, vector<2x64xf32>
    %cst_12 = arith.constant dense<0.000000e+00> : vector<2x64xf32>
    %17 = tpu.matmul %16, %9, %cst_12 {dimension_numbers = #tpu.dot_dimension_numbers<[1], [0], [0], [1], [0, 0, 1, 1], [], []>} : vector<2x64xf32>, vector<64x64xf32>, vector<2x64xf32> -> vector<2x64xf32>
    %18 = vector.broadcast %10 : vector<1x64xf32> to vector<2x64xf32>
    %19 = arith.addf %17, %18 : vector<2x64xf32>
    %c0_13 = arith.constant 0 : index
    %c0_14 = arith.constant 0 : index
    %c0_15 = arith.constant 0 : index
    %20 = vector.load %arg5[%c0_13, %c0_14, %c0_15] : memref<1x2x128xf32, #tpu.memory_space<vmem>>, vector<1x2x64xf32>
    %21 = vector.shape_cast %20 : vector<1x2x64xf32> to vector<2x64xf32>
    %22 = vector.shape_cast %19 : vector<2x64xf32> to vector<1x2x64xf32>
    tpu.vector_store %arg5[%c0_13, %c0_14, %c0_15], %22 {strides = array<i32>} : memref<1x2x128xf32, #tpu.memory_space<vmem>>, vector<1x2x64xf32>,
    %c0_16 = arith.constant 0 : index
    %c0_17 = arith.constant 0 : index
    %c64 = arith.constant 64 : index
    %23 = vector.load %arg5[%c0_16, %c0_17, %c64] : memref<1x2x128xf32, #tpu.memory_space<vmem>>, vector<1x2x64xf32>
    %24 = vector.shape_cast %23 : vector<1x2x64xf32> to vector<2x64xf32>
    %25 = vector.shape_cast %7 : vector<2x64xf32> to vector<1x2x64xf32>
    tpu.vector_store %arg5[%c0_16, %c0_17, %c64], %25 {strides = array<i32>} : memref<1x2x128xf32, #tpu.memory_space<vmem>>, vector<1x2x64xf32>,
    return
  }
  func.func @transform_0(%arg0: i32) -> (i32, i32, i32) {
    %c0_i32 = arith.constant 0 : i32
    %c0_i32_0 = arith.constant 0 : i32
    %c0_i32_1 = arith.constant 0 : i32
    return %arg0, %c0_i32, %c0_i32_0 : i32, i32, i32
  }
  func.func @transform_1(%arg0: i32) -> (i32, i32) {
    %c0_i32 = arith.constant 0 : i32
    %c0_i32_0 = arith.constant 0 : i32
    %c0_i32_1 = arith.constant 0 : i32
    return %c0_i32, %c0_i32_0 : i32, i32
  }
  func.func @transform_2(%arg0: i32) -> (i32, i32) {
    %c0_i32 = arith.constant 0 : i32
    %c0_i32_0 = arith.constant 0 : i32
    %c0_i32_1 = arith.constant 0 : i32
    return %c0_i32, %c0_i32_0 : i32, i32
  }
  func.func @transform_3(%arg0: i32) -> (i32, i32) {
    %c0_i32 = arith.constant 0 : i32
    %c0_i32_0 = arith.constant 0 : i32
    %c0_i32_1 = arith.constant 0 : i32
    return %c0_i32, %c0_i32_0 : i32, i32
  }
  func.func @transform_4(%arg0: i32) -> (i32, i32, i32) {
    %c0_i32 = arith.constant 0 : i32
    %c0_i32_0 = arith.constant 0 : i32
    %c0_i32_1 = arith.constant 0 : i32
    return %arg0, %c0_i32, %c0_i32_0 : i32, i32, i32
  }
}

</mosaic_0001>

<llo_original>
// kernel: simsiam_forward.4
$region0: #{simsiam_forward.4}
  #allocation0 [shape = 'u32[]', space=smem, size = 0x4, offset = 0x4, fixed_abs, tag = 'smem constant byte address 0x4 - core index']
  #allocation1 [shape = 'u32[144,128]{1,0:T(1,128)}', space=vmem, size = 0x12000, scoped, tag = 'internal scratch']
  %s0 = inlined_call_operand.vmem [shape: bf16[4,64,128], index: 0, kind: input, shape index: {}]
  %s1 = inlined_call_operand.vmem [shape: f32[128,128], index: 1, kind: input, shape index: {}]
  %s2 = inlined_call_operand.vmem [shape: f32[128,128], index: 2, kind: input, shape index: {}]
  %s3 = inlined_call_operand.vmem [shape: f32[1,128], index: 3, kind: input, shape index: {}]
  %s4 = inlined_call_operand.vmem [shape: f32[2,2,256], index: 4, kind: output, shape index: {}]
  %s5 = sld [smem:[#allocation0]]
  $region49: #{simsiam_forward.4} parent=0
    _
  %s7 = ssub.s32 1, %s5
  %s8 = scalar_select 0, %s7, %s5
  loop: start=0, step=1, limit=4
  $region2: #{simsiam_forward.4} parent=0 // loop_pre_header
    _
  $region3: #{simsiam_forward.4} parent=0 // loop_header
    %s10 = sphi 0, %s14
    %p11 = scmp.ge.s32.totalorder %s10, 4
    %s20 = sphi 0, %s22
    %s23 = sphi 0, %s20
    %s24 = sphi 0, %s23
    %s40 = sphi 0, %s24
    %s44 = sphi 0, %s44
    %s46 = sphi 0, %s44
    %s47 = sphi 0, %s46
    %s61 = sphi 0, %s47
    %s65 = sphi 0, %s65
    %s67 = sphi 0, %s65
    %s68 = sphi 0, %s67
    %s82 = sphi 0, %s68
    %s86 = sphi 0, %s86
    %s88 = sphi 0, %s86
    %s89 = sphi 0, %s88
    %s103 = sphi 0, %s89
    %s109 = sphi 0, %s111
    %s112 = sphi 0, %s109
    %s113 = sphi 0, %s112
    %s129 = sphi 0, %s113
  $region4: #{simsiam_forward.4} parent=0 // loop_header_branch
    %13 = sbr.rel (%p11) target = $region8
  $region5: #{simsiam_forward.4} parent=0 // loop_body
    %s15 = ssub.s32 %s10, 1
    %s16 = ssub.s32 %s10, 2
    %s17 = sadd.s32 %s10, 1
    %s18 = ssub.s32 %s10, %s17
    %p19 = scmp.eq.s32.totalorder %s18, 0
    %s21 = sadd.s32 %s20, 1
    %s22 = scalar_select %p19, %s20, %s21
    %p25 = pneg %p19
    %p26 = scmp.eq.s32.totalorder %s10, 1
    %p27 = por %p25, %p26
    %p28 = scmp.ne.s32.totalorder %s20, %s23
    %p29 = scmp.eq.s32.totalorder %s10, 0
    %p30 = por %p28, %p29
    %p31 = scmp.ne.s32.totalorder %s20, %s23
    %p32 = scmp.eq.s32.totalorder %s15, 1
    %p33 = por %p31, %p32
    %p34 = scmp.ne.s32.totalorder %s23, %s24
    %p35 = scmp.eq.s32.totalorder %s15, 0
    %p36 = por %p34, %p35
    %p37 = scmp.ne.s32.totalorder %s23, %s24
    %p38 = scmp.eq.s32.totalorder %s16, 1
    %p39 = por %p37, %p38
    %p41 = scmp.ne.s32.totalorder %s24, %s40
    %p42 = scmp.eq.s32.totalorder %s16, 0
    %p43 = por %p41, %p42
    %s45 = sadd.s32 %s44, 1
    %p48 = scmp.eq.s32.totalorder %s10, 1
    %p49 = scmp.ne.s32.totalorder %s44, %s46
    %p50 = scmp.eq.s32.totalorder %s10, 0
    %p51 = por %p49, %p50
    %p52 = scmp.ne.s32.totalorder %s44, %s46
    %p53 = scmp.eq.s32.totalorder %s15, 1
    %p54 = por %p52, %p53
    %p55 = scmp.ne.s32.totalorder %s46, %s47
    %p56 = scmp.eq.s32.totalorder %s15, 0
    %p57 = por %p55, %p56
    %p58 = scmp.ne.s32.totalorder %s46, %s47
    %p59 = scmp.eq.s32.totalorder %s16, 1
    %p60 = por %p58, %p59
    %p62 = scmp.ne.s32.totalorder %s47, %s61
    %p63 = scmp.eq.s32.totalorder %s16, 0
    %p64 = por %p62, %p63
    %s66 = sadd.s32 %s65, 1
    %p69 = scmp.eq.s32.totalorder %s10, 1
    %p70 = scmp.ne.s32.totalorder %s65, %s67
    %p71 = scmp.eq.s32.totalorder %s10, 0
    %p72 = por %p70, %p71
    %p73 = scmp.ne.s32.totalorder %s65, %s67
    %p74 = scmp.eq.s32.totalorder %s15, 1
    %p75 = por %p73, %p74
    %p76 = scmp.ne.s32.totalorder %s67, %s68
    %p77 = scmp.eq.s32.totalorder %s15, 0
    %p78 = por %p76, %p77
    %p79 = scmp.ne.s32.totalorder %s67, %s68
    %p80 = scmp.eq.s32.totalorder %s16, 1
    %p81 = por %p79, %p80
    %p83 = scmp.ne.s32.totalorder %s68, %s82
    %p84 = scmp.eq.s32.totalorder %s16, 0
    %p85 = por %p83, %p84
    %s87 = sadd.s32 %s86, 1
    %p90 = scmp.eq.s32.totalorder %s10, 1
    %p91 = scmp.ne.s32.totalorder %s86, %s88
    %p92 = scmp.eq.s32.totalorder %s10, 0
    %p93 = por %p91, %p92
    %p94 = scmp.ne.s32.totalorder %s86, %s88
    %p95 = scmp.eq.s32.totalorder %s15, 1
    %p96 = por %p94, %p95
    %p97 = scmp.ne.s32.totalorder %s88, %s89
    %p98 = scmp.eq.s32.totalorder %s15, 0
    %p99 = por %p97, %p98
    %p100 = scmp.ne.s32.totalorder %s88, %s89
    %p101 = scmp.eq.s32.totalorder %s16, 1
    %p102 = por %p100, %p101
    %p104 = scmp.ne.s32.totalorder %s89, %s103
    %p105 = scmp.eq.s32.totalorder %s16, 0
    %p106 = por %p104, %p105
    %s107 = ssub.s32 %s10, %s17
    %p108 = scmp.eq.s32.totalorder %s107, 0
    %s110 = sadd.s32 %s109, 1
    %s111 = scalar_select %p108, %s109, %s110
    %p114 = pneg %p108
    %p115 = scmp.eq.s32.totalorder %s10, 1
    %p116 = por %p114, %p115
    %p117 = scmp.ne.s32.totalorder %s109, %s112
    %p118 = scmp.eq.s32.totalorder %s10, 0
    %p119 = por %p117, %p118
    %p120 = scmp.ne.s32.totalorder %s109, %s112
    %p121 = scmp.eq.s32.totalorder %s15, 1
    %p122 = por %p120, %p121
    %p123 = scmp.ne.s32.totalorder %s112, %s113
    %p124 = scmp.eq.s32.totalorder %s15, 0
    %p125 = por %p123, %p124
    %p126 = scmp.ne.s32.totalorder %s112, %s113
    %p127 = scmp.eq.s32.totalorder %s16, 1
    %p128 = por %p126, %p127
    %p130 = scmp.ne.s32.totalorder %s113, %s129
    %p131 = scmp.eq.s32.totalorder %s16, 0
    %p132 = por %p130, %p131
    %p133 = scmp.le.s32.totalorder 1, %s10
    %p134 = scmp.lt.s32.totalorder %s10, 3
    %p135 = pnand %p133, %p134
    %p136 = pneg %p135
    // Predicated region
    $region9: #{simsiam_forward.4} parent=5 // pred_check
      _
    $region10: #{simsiam_forward.4} parent=5 // pred_check_branch
      %138 = sbr.rel (%p135) target = $region12
    $region11: #{simsiam_forward.4} parent=5 // pred_region
      %s139 = ssub.s32 %s10, 1
      // Predicated region
      $region13: #{simsiam_forward.4} parent=11 // pred_check
        %p140 = pneg %p57
      $region14: #{simsiam_forward.4} parent=11 // pred_check_branch
        %142 = sbr.rel (%p140) target = $region16
      $region15: #{simsiam_forward.4} parent=11 // pred_region
        _
      $region16: #{simsiam_forward.4} parent=11 // pred_fallthru
        _
      // Predicated region
      $region17: #{simsiam_forward.4} parent=11 // pred_check
        %p143 = pneg %p78
      $region18: #{simsiam_forward.4} parent=11 // pred_check_branch
        %145 = sbr.rel (%p143) target = $region20
      $region19: #{simsiam_forward.4} parent=11 // pred_region
        _
      $region20: #{simsiam_forward.4} parent=11 // pred_fallthru
        _
      // Predicated region
      $region21: #{simsiam_forward.4} parent=11 // pred_check
        %p146 = pneg %p99
      $region22: #{simsiam_forward.4} parent=11 // pred_check_branch
        %148 = sbr.rel (%p146) target = $region24
      $region23: #{simsiam_forward.4} parent=11 // pred_region
        _
      $region24: #{simsiam_forward.4} parent=11 // pred_fallthru
        _
    $region12: #{simsiam_forward.4} parent=5 // pred_fallthru
      _
    %p149 = scmp.lt.s32.totalorder %s10, 2
    // Predicated region
    $region25: #{simsiam_forward.4} parent=5 // pred_check
      %p150 = pneg %p149
    $region26: #{simsiam_forward.4} parent=5 // pred_check_branch
      %152 = sbr.rel (%p150) target = $region28
    $region27: #{simsiam_forward.4} parent=5 // pred_region
      // Predicated region
      $region29: #{simsiam_forward.4} parent=27 // pred_check
        %p153 = pneg %p30
      $region30: #{simsiam_forward.4} parent=27 // pred_check_branch
        %155 = sbr.rel (%p153) target = $region32
      $region31: #{simsiam_forward.4} parent=27 // pred_region
        %s156 = smul.u32 2, %s10
        %p157 = scmp.lt.s32.totalorder %s156, 3
        %s158 = scalar_select %p157, %s156, 3
        %s159 = smul.addr %s158, 8
        %s160 = smul.addr %s159, 4
        %s161 = scalar_lea.vmem %s0, %s160
        %s162 = smul.u32 2, %s10
      $region32: #{simsiam_forward.4} parent=27 // pred_fallthru
        _
    $region28: #{simsiam_forward.4} parent=5 // pred_fallthru
      _
    %p163 = scmp.le.s32.totalorder 1, %s10
    %p164 = scmp.lt.s32.totalorder %s10, 3
    %p165 = pnand %p163, %p164
    %p166 = pneg %p165
    // Predicated region
    $region33: #{simsiam_forward.4} parent=5 // pred_check
      _
    $region34: #{simsiam_forward.4} parent=5 // pred_check_branch
      %168 = sbr.rel (%p165) target = $region36
    $region35: #{simsiam_forward.4} parent=5 // pred_region
      %s169 = ssub.s32 %s10, 1
      %s170 = smul.u32 2, %s15
      %p171 = scmp.lt.s32.totalorder %s170, 3
      %s172 = scalar_select %p171, %s170, 3
      %s173 = smul.addr %s172, 8
      %s174 = smul.addr %s173, 4
      %s175 = scalar_lea.vmem %s0, %s174
      %p176 = pneg %p36
      %p177 = pneg %p33
      %p178 = pneg %p57
      %p179 = pneg %p54
      %p180 = pneg %p78
      %p181 = pneg %p75
      %p182 = pneg %p99
      %p183 = pneg %p96
      %p184 = pneg %p125
      %p185 = pneg %p122
      %p186 = scmp.lt.s32.totalorder %s15, 1
      %s187 = scalar_select %p186, %s15, 1
      %s188 = smul.addr %s187, 2
      %s189 = smul.addr %s188, 2
      %s190 = scalar_lea.vmem %s4, %s189
      %s191 = smul.u32 2, %s15
      %p192 = scmp.lt.s32.totalorder %s191, 3
      %s193 = scalar_select %p192, %s191, 3
      %s194 = smul.addr %s193, 8
      %s195 = smul.addr %s194, 4
      %s196 = scalar_lea.vmem %s0, %s195
      %s197 = smul.u32 2, %s15
      %p198 = scmp.lt.s32.totalorder %s15, 1
      %s199 = scalar_select %p198, %s15, 1
      %s200 = smul.addr %s199, 2
      %s201 = smul.addr %s200, 2
      %s202 = scalar_lea.vmem %s4, %s201
      %v203 = vld [vmem:[%s196] sm:$0xf]
      %v204 = vld [vmem:[%s196 + $0x4] sm:$0xf]
      %v205 = vld [vmem:[%s196 + $0x8] sm:$0xf]
      %v206 = vld [vmem:[%s196 + $0xc] sm:$0xf]
      %v207 = vld [vmem:[%s196 + $0x10] sm:$0xf]
      %v208 = vld [vmem:[%s196 + $0x14] sm:$0xf]
      %v209 = vld [vmem:[%s196 + $0x18] sm:$0xf]
      %v210 = vld [vmem:[%s196 + $0x1c] sm:$0xf]
      %v211 = vld [vmem:[%s196 + $0x20] sm:$0xf]
      %v212 = vld [vmem:[%s196 + $0x24] sm:$0xf]
      %v213 = vld [vmem:[%s196 + $0x28] sm:$0xf]
      %v214 = vld [vmem:[%s196 + $0x2c] sm:$0xf]
      %v215 = vld [vmem:[%s196 + $0x30] sm:$0xf]
      %v216 = vld [vmem:[%s196 + $0x34] sm:$0xf]
      %v217 = vld [vmem:[%s196 + $0x38] sm:$0xf]
      %v218 = vld [vmem:[%s196 + $0x3c] sm:$0xf]
      %v219 = vunpack.c.l.bf16 %v203
      %v220 = vunpack.c.l.bf16 %v204
      %v221 = vunpack.c.l.bf16 %v205
      %v222 = vunpack.c.l.bf16 %v206
      %v223 = vunpack.c.l.bf16 %v207
      %v224 = vunpack.c.l.bf16 %v208
      %v225 = vunpack.c.l.bf16 %v209
      %v226 = vunpack.c.l.bf16 %v210
      %v227 = vunpack.c.l.bf16 %v211
      %v228 = vunpack.c.l.bf16 %v212
      %v229 = vunpack.c.l.bf16 %v213
      %v230 = vunpack.c.l.bf16 %v214
      %v231 = vunpack.c.l.bf16 %v215
      %v232 = vunpack.c.l.bf16 %v216
      %v233 = vunpack.c.l.bf16 %v217
      %v234 = vunpack.c.l.bf16 %v218
      %v235 = vadd.f32 %v219, %v220
      %v236 = vadd.f32 %v235, %v221
      %v237 = vadd.f32 %v236, %v222
      %v238 = vadd.f32 %v237, %v223
      %v239 = vadd.f32 %v238, %v224
      %v240 = vadd.f32 %v239, %v225
      %v241 = vadd.f32 %v240, %v226
      %v242 = vrot.slane %v241, 4
      %v243 = vadd.f32 %v241, %v242
      %v244 = vrot.slane %v243, 2
      %v245 = vadd.f32 %v243, %v244
      %v246 = vrot.slane %v245, 1
      %v247 = vadd.f32 %v245, %v246
      %v248 = vadd.f32 %v227, %v228
      %v249 = vadd.f32 %v248, %v229
      %v250 = vadd.f32 %v249, %v230
      %v251 = vadd.f32 %v250, %v231
      %v252 = vadd.f32 %v251, %v232
      %v253 = vadd.f32 %v252, %v233
      %v254 = vadd.f32 %v253, %v234
      %v255 = vrot.slane %v254, 4
      %v256 = vadd.f32 %v254, %v255
      %v257 = vrot.slane %v256, 2
      %v258 = vadd.f32 %v256, %v257
      %v259 = vrot.slane %v258, 1
      %v260 = vadd.f32 %v258, %v259
      %v261 = vmul.f32 %v247, 0.015625
      %v262 = vmul.f32 %v260, 0.015625
      %v263 = vld [vmem:[%s1] sm:$0xff]
      %v264 = vld [vmem:[%s1 + $0x8] sm:$0xff]
      %v265 = vld [vmem:[%s1 + $0x10] sm:$0xff]
      %v266 = vld [vmem:[%s1 + $0x18] sm:$0xff]
      %v267 = vld [vmem:[%s1 + $0x20] sm:$0xff]
      %v268 = vld [vmem:[%s1 + $0x28] sm:$0xff]
      %v269 = vld [vmem:[%s1 + $0x30] sm:$0xff]
      %v270 = vld [vmem:[%s1 + $0x38] sm:$0xff]
      %v271 = vld [vmem:[%s1 + $0x40] sm:$0xff]
      %v272 = vld [vmem:[%s1 + $0x48] sm:$0xff]
      %v273 = vld [vmem:[%s1 + $0x50] sm:$0xff]
      %v274 = vld [vmem:[%s1 + $0x58] sm:$0xff]
      %v275 = vld [vmem:[%s1 + $0x60] sm:$0xff]
      %v276 = vld [vmem:[%s1 + $0x68] sm:$0xff]
      %v277 = vld [vmem:[%s1 + $0x70] sm:$0xff]
      %v278 = vld [vmem:[%s1 + $0x78] sm:$0xff]
      %v279 = vld [vmem:[%s2] sm:$0xff]
      %v280 = vld [vmem:[%s2 + $0x8] sm:$0xff]
      %v281 = vld [vmem:[%s2 + $0x10] sm:$0xff]
      %v282 = vld [vmem:[%s2 + $0x18] sm:$0xff]
      %v283 = vld [vmem:[%s2 + $0x20] sm:$0xff]
      %v284 = vld [vmem:[%s2 + $0x28] sm:$0xff]
      %v285 = vld [vmem:[%s2 + $0x30] sm:$0xff]
      %v286 = vld [vmem:[%s2 + $0x38] sm:$0xff]
      %v287 = vld [vmem:[%s2 + $0x40] sm:$0xff]
      %v288 = vld [vmem:[%s2 + $0x48] sm:$0xff]
      %v289 = vld [vmem:[%s2 + $0x50] sm:$0xff]
      %v290 = vld [vmem:[%s2 + $0x58] sm:$0xff]
      %v291 = vld [vmem:[%s2 + $0x60] sm:$0xff]
      %v292 = vld [vmem:[%s2 + $0x68] sm:$0xff]
      %v293 = vld [vmem:[%s2 + $0x70] sm:$0xff]
      %v294 = vld [vmem:[%s2 + $0x78] sm:$0xff]
      %v295 = vld [vmem:[%s3] sm:$0x1]
      %vm298 = vcmask 1041409
      %v299 = vsel %vm298, %v262, %v261
      %301 = vmatprep.subr.mxu0 0.0
      %302 = vmatpush1.msra.mxu0 %v278
      %303 = vmatprep.subr.mxu0 0.0
      %304 = vmatpush1.msra.mxu0 %v277
      %305 = vmatprep.subr.mxu0 0.0
      %306 = vmatpush1.msra.mxu0 %v276
      %307 = vmatprep.subr.mxu0 0.0
      %308 = vmatpush1.msra.mxu0 %v275
      %309 = vmatprep.subr.mxu0 0.0
      %310 = vmatpush1.msra.mxu0 %v274
      %311 = vmatprep.subr.mxu0 0.0
      %312 = vmatpush1.msra.mxu0 %v273
      %313 = vmatprep.subr.mxu0 0.0
      %314 = vmatpush1.msra.mxu0 %v272
      %315 = vmatprep.subr.mxu0 0.0
      %316 = vmatpush1.msra.mxu0 %v271
      %317 = vmatprep.subr.mxu0 0.0
      %318 = vmatpush1.msra.mxu0 %v270
      %319 = vmatprep.subr.mxu0 0.0
      %320 = vmatpush1.msra.mxu0 %v269
      %321 = vmatprep.subr.mxu0 0.0
      %322 = vmatpush1.msra.mxu0 %v268
      %323 = vmatprep.subr.mxu0 0.0
      %324 = vmatpush1.msra.mxu0 %v267
      %325 = vmatprep.subr.mxu0 0.0
      %326 = vmatpush1.msra.mxu0 %v266
      %327 = vmatprep.subr.mxu0 0.0
      %328 = vmatpush1.msra.mxu0 %v265
      %329 = vmatprep.subr.mxu0 0.0
      %330 = vmatpush1.msra.mxu0 %v264
      %331 = vmatprep.subr.mxu0 0.0
      %332 = vmatpush1.msra.mxu0 %v263
      %333 = vmatprep.subr.mxu0 0.0
      %334 = vmatpush2.msra.mxu0 0.0
      %335 = vmatprep.subr.mxu0 0.0
      %336 = vmatpush2.msra.mxu0 0.0
      %337 = vmatprep.subr.mxu0 0.0
      %338 = vmatpush2.msra.mxu0 0.0
      %339 = vmatprep.subr.mxu0 0.0
      %340 = vmatpush2.msra.mxu0 0.0
      %341 = vmatprep.subr.mxu0 0.0
      %342 = vmatpush2.msra.mxu0 0.0
      %343 = vmatprep.subr.mxu0 0.0
      %344 = vmatpush2.msra.mxu0 0.0
      %345 = vmatprep.subr.mxu0 0.0
      %346 = vmatpush2.msra.mxu0 0.0
      %347 = vmatprep.subr.mxu0 0.0
      %348 = vmatpush2.msra.mxu0 0.0
      %349 = vmatprep.subr.mxu0 0.0
      %350 = vmatpush2.msra.mxu0 0.0
      %351 = vmatprep.subr.mxu0 0.0
      %352 = vmatpush2.msra.mxu0 0.0
      %353 = vmatprep.subr.mxu0 0.0
      %354 = vmatpush2.msra.mxu0 0.0
      %355 = vmatprep.subr.mxu0 0.0
      %356 = vmatpush2.msra.mxu0 0.0
      %357 = vmatprep.subr.mxu0 0.0
      %358 = vmatpush2.msra.mxu0 0.0
      %359 = vmatprep.subr.mxu0 0.0
      %360 = vmatpush2.msra.mxu0 0.0
      %361 = vmatprep.subr.mxu0 0.0
      %362 = vmatpush2.msra.mxu0 0.0
      %363 = vmatprep.subr.mxu0 0.0
      %364 = vmatpush2.msra.mxu0 0.0
      %365 = vmatprep.mubr.f32.mxu0 0.0
      %366 = vmatmul.mubr.f32.gmra.mxu0 %v299
      %v367 = vpop.f32.mrf.mxu0
      %v368 = vadd.f32 0.0, %v367
      %v369 = vpop.f32.mrf.mxu0
      %370 = vdwg.mxu0
      %vm371 = vcmp.gt.f32.partialorder %v368, 0.0
      %v372 = vmul.f32 %v368, 0.01
      %v373 = vsel %vm371, %v368, %v372
      %v375 = vlaneseq
      %v376 = vshrl.u32 %v375, 7
      %v377 = vsub.s32 0, %v376
      %v378 = vrot.slane %v295, %v377
      %380 = vmatprep.subr.mxu0 0.0
      %381 = vmatpush1.msra.mxu0 %v294
      %382 = vmatprep.subr.mxu0 0.0
      %383 = vmatpush1.msra.mxu0 %v293
      %384 = vmatprep.subr.mxu0 0.0
      %385 = vmatpush1.msra.mxu0 %v292
      %386 = vmatprep.subr.mxu0 0.0
      %387 = vmatpush1.msra.mxu0 %v291
      %388 = vmatprep.subr.mxu0 0.0
      %389 = vmatpush1.msra.mxu0 %v290
      %390 = vmatprep.subr.mxu0 0.0
      %391 = vmatpush1.msra.mxu0 %v289
      %392 = vmatprep.subr.mxu0 0.0
      %393 = vmatpush1.msra.mxu0 %v288
      %394 = vmatprep.subr.mxu0 0.0
      %395 = vmatpush1.msra.mxu0 %v287
      %396 = vmatprep.subr.mxu0 0.0
      %397 = vmatpush1.msra.mxu0 %v286
      %398 = vmatprep.subr.mxu0 0.0
      %399 = vmatpush1.msra.mxu0 %v285
      %400 = vmatprep.subr.mxu0 0.0
      %401 = vmatpush1.msra.mxu0 %v284
      %402 = vmatprep.subr.mxu0 0.0
      %403 = vmatpush1.msra.mxu0 %v283
      %404 = vmatprep.subr.mxu0 0.0
      %405 = vmatpush1.msra.mxu0 %v282
      %406 = vmatprep.subr.mxu0 0.0
      %407 = vmatpush1.msra.mxu0 %v281
      %408 = vmatprep.subr.mxu0 0.0
      %409 = vmatpush1.msra.mxu0 %v280
      %410 = vmatprep.subr.mxu0 0.0
      %411 = vmatpush1.msra.mxu0 %v279
      %412 = vmatprep.subr.mxu0 0.0
      %413 = vmatpush2.msra.mxu0 0.0
      %414 = vmatprep.subr.mxu0 0.0
      %415 = vmatpush2.msra.mxu0 0.0
      %416 = vmatprep.subr.mxu0 0.0
      %417 = vmatpush2.msra.mxu0 0.0
      %418 = vmatprep.subr.mxu0 0.0
      %419 = vmatpush2.msra.mxu0 0.0
      %420 = vmatprep.subr.mxu0 0.0
      %421 = vmatpush2.msra.mxu0 0.0
      %422 = vmatprep.subr.mxu0 0.0
      %423 = vmatpush2.msra.mxu0 0.0
      %424 = vmatprep.subr.mxu0 0.0
      %425 = vmatpush2.msra.mxu0 0.0
      %426 = vmatprep.subr.mxu0 0.0
      %427 = vmatpush2.msra.mxu0 0.0
      %428 = vmatprep.subr.mxu0 0.0
      %429 = vmatpush2.msra.mxu0 0.0
      %430 = vmatprep.subr.mxu0 0.0
      %431 = vmatpush2.msra.mxu0 0.0
      %432 = vmatprep.subr.mxu0 0.0
      %433 = vmatpush2.msra.mxu0 0.0
      %434 = vmatprep.subr.mxu0 0.0
      %435 = vmatpush2.msra.mxu0 0.0
      %436 = vmatprep.subr.mxu0 0.0
      %437 = vmatpush2.msra.mxu0 0.0
      %438 = vmatprep.subr.mxu0 0.0
      %439 = vmatpush2.msra.mxu0 0.0
      %440 = vmatprep.subr.mxu0 0.0
      %441 = vmatpush2.msra.mxu0 0.0
      %442 = vmatprep.subr.mxu0 0.0
      %443 = vmatpush2.msra.mxu0 0.0
      %444 = vmatprep.mubr.f32.mxu0 0.0
      %445 = vmatmul.mubr.f32.gmra.mxu0 %v373
      %v446 = vpop.f32.mrf.mxu0
      %v447 = vadd.f32 %v378, %v446
      %v448 = vpop.f32.mrf.mxu0
      %449 = vdwg.mxu0
      %450 = vst [vmem:[%s202] sm:$0x3] %v447
      %v452 = vunpack.c.l.s4 1983009808
      %v453 = vunpack.c.0.s8 %v452
      %v454 = vlaneseq
      %v455 = vshrl.u32 %v454, 7
      %v456 = vsub.s32 %v453, %v455
      %v457 = vrot.slane %v261, %v456
      %v459 = vunpack.c.l.s4 1983009808
      %v460 = vunpack.c.0.s8 %v459
      %v461 = vlaneseq
      %v462 = vshrl.u32 %v461, 7
      %v463 = vsub.s32 %v460, %v462
      %v464 = vrot.slane %v262, %v463
      %vm465 = vcmask 1044484
      %v466 = vsel %vm465, %v457, %v457
      %vm467 = vcmask 1046534
      %v468 = vsel %vm467, %v457, %v466
      %v469 = vrot.slane %v464, 7
      %v470 = vsel %vm298, %v469, %v468
      %vm471 = vcmask 1043459
      %v472 = vsel %vm471, %v469, %v470
      %vm473 = vcmask 1045509
      %v474 = vsel %vm473, %v469, %v472
      %vm475 = vcmask 1047559
      %v476 = vsel %vm475, %v469, %v474
      %478 = vst [vmem:[%s202 + $0x2] sm:$0x3] %v476
      %p479 = scmp.lt.s32.totalorder %s15, 1
      %s480 = scalar_select %p479, %s15, 1
      %s481 = smul.addr %s480, 2
      %s482 = smul.addr %s481, 2
      %s483 = scalar_lea.vmem %s4, %s482
      // Predicated region
      $region37: #{simsiam_forward.4} parent=35 // pred_check
        %p484 = pneg %p122
      $region38: #{simsiam_forward.4} parent=35 // pred_check_branch
        %486 = sbr.rel (%p484) target = $region40
      $region39: #{simsiam_forward.4} parent=35 // pred_region
        _
      $region40: #{simsiam_forward.4} parent=35 // pred_fallthru
        _
    $region36: #{simsiam_forward.4} parent=5 // pred_fallthru
      _
    %p487 = scmp.le.s32.totalorder 2, %s10
    // Predicated region
    $region41: #{simsiam_forward.4} parent=5 // pred_check
      %p488 = pneg %p487
    $region42: #{simsiam_forward.4} parent=5 // pred_check_branch
      %490 = sbr.rel (%p488) target = $region44
    $region43: #{simsiam_forward.4} parent=5 // pred_region
      %s491 = ssub.s32 %s10, 2
      // Predicated region
      $region45: #{simsiam_forward.4} parent=43 // pred_check
        %p492 = pneg %p128
      $region46: #{simsiam_forward.4} parent=43 // pred_check_branch
        %494 = sbr.rel (%p492) target = $region48
      $region47: #{simsiam_forward.4} parent=43 // pred_region
        %p495 = scmp.lt.s32.totalorder %s16, 1
        %s496 = scalar_select %p495, %s16, 1
        %s497 = smul.addr %s496, 2
        %s498 = smul.addr %s497, 2
        %s499 = scalar_lea.vmem %s4, %s498
      $region48: #{simsiam_forward.4} parent=43 // pred_fallthru
        _
    $region44: #{simsiam_forward.4} parent=5 // pred_fallthru
      _
  $region6: #{simsiam_forward.4} parent=0 // loop_footer
    %s14 = sadd.s32 1, %s10
  $region7: #{simsiam_forward.4} parent=0 // loop_footer_branch
    %9 = sbr.rel target = $region3
  $region8: #{simsiam_forward.4} parent=0 // loop_exit
    _

// kernel: simsiam_forward.5
$region0: #{simsiam_forward.5}
  #allocation0 [shape = 'u32[]', space=smem, size = 0x4, offset = 0x4, fixed_abs, tag = 'smem constant byte address 0x4 - core index']
  #allocation1 [shape = 'u32[144,128]{1,0:T(1,128)}', space=vmem, size = 0x12000, scoped, tag = 'internal scratch']
  %s0 = inlined_call_operand.vmem [shape: bf16[4,16,256], index: 0, kind: input, shape index: {}]
  %s1 = inlined_call_operand.vmem [shape: f32[256,256], index: 1, kind: input, shape index: {}]
  %s2 = inlined_call_operand.vmem [shape: f32[256,256], index: 2, kind: input, shape index: {}]
  %s3 = inlined_call_operand.vmem [shape: f32[1,256], index: 3, kind: input, shape index: {}]
  %s4 = inlined_call_operand.vmem [shape: f32[2,2,512], index: 4, kind: output, shape index: {}]
  %s5 = sld [smem:[#allocation0]]
  $region49: #{simsiam_forward.5} parent=0
    _
  %s7 = ssub.s32 1, %s5
  %s8 = scalar_select 0, %s7, %s5
  loop: start=0, step=1, limit=4
  $region2: #{simsiam_forward.5} parent=0 // loop_pre_header
    _
  $region3: #{simsiam_forward.5} parent=0 // loop_header
    %s10 = sphi 0, %s14
    %p11 = scmp.ge.s32.totalorder %s10, 4
    %s20 = sphi 0, %s22
    %s23 = sphi 0, %s20
    %s24 = sphi 0, %s23
    %s40 = sphi 0, %s24
    %s44 = sphi 0, %s44
    %s46 = sphi 0, %s44
    %s47 = sphi 0, %s46
    %s61 = sphi 0, %s47
    %s65 = sphi 0, %s65
    %s67 = sphi 0, %s65
    %s68 = sphi 0, %s67
    %s82 = sphi 0, %s68
    %s86 = sphi 0, %s86
    %s88 = sphi 0, %s86
    %s89 = sphi 0, %s88
    %s103 = sphi 0, %s89
    %s109 = sphi 0, %s111
    %s112 = sphi 0, %s109
    %s113 = sphi 0, %s112
    %s129 = sphi 0, %s113
  $region4: #{simsiam_forward.5} parent=0 // loop_header_branch
    %13 = sbr.rel (%p11) target = $region8
  $region5: #{simsiam_forward.5} parent=0 // loop_body
    %s15 = ssub.s32 %s10, 1
    %s16 = ssub.s32 %s10, 2
    %s17 = sadd.s32 %s10, 1
    %s18 = ssub.s32 %s10, %s17
    %p19 = scmp.eq.s32.totalorder %s18, 0
    %s21 = sadd.s32 %s20, 1
    %s22 = scalar_select %p19, %s20, %s21
    %p25 = pneg %p19
    %p26 = scmp.eq.s32.totalorder %s10, 1
    %p27 = por %p25, %p26
    %p28 = scmp.ne.s32.totalorder %s20, %s23
    %p29 = scmp.eq.s32.totalorder %s10, 0
    %p30 = por %p28, %p29
    %p31 = scmp.ne.s32.totalorder %s20, %s23
    %p32 = scmp.eq.s32.totalorder %s15, 1
    %p33 = por %p31, %p32
    %p34 = scmp.ne.s32.totalorder %s23, %s24
    %p35 = scmp.eq.s32.totalorder %s15, 0
    %p36 = por %p34, %p35
    %p37 = scmp.ne.s32.totalorder %s23, %s24
    %p38 = scmp.eq.s32.totalorder %s16, 1
    %p39 = por %p37, %p38
    %p41 = scmp.ne.s32.totalorder %s24, %s40
    %p42 = scmp.eq.s32.totalorder %s16, 0
    %p43 = por %p41, %p42
    %s45 = sadd.s32 %s44, 1
    %p48 = scmp.eq.s32.totalorder %s10, 1
    %p49 = scmp.ne.s32.totalorder %s44, %s46
    %p50 = scmp.eq.s32.totalorder %s10, 0
    %p51 = por %p49, %p50
    %p52 = scmp.ne.s32.totalorder %s44, %s46
    %p53 = scmp.eq.s32.totalorder %s15, 1
    %p54 = por %p52, %p53
    %p55 = scmp.ne.s32.totalorder %s46, %s47
    %p56 = scmp.eq.s32.totalorder %s15, 0
    %p57 = por %p55, %p56
    %p58 = scmp.ne.s32.totalorder %s46, %s47
    %p59 = scmp.eq.s32.totalorder %s16, 1
    %p60 = por %p58, %p59
    %p62 = scmp.ne.s32.totalorder %s47, %s61
    %p63 = scmp.eq.s32.totalorder %s16, 0
    %p64 = por %p62, %p63
    %s66 = sadd.s32 %s65, 1
    %p69 = scmp.eq.s32.totalorder %s10, 1
    %p70 = scmp.ne.s32.totalorder %s65, %s67
    %p71 = scmp.eq.s32.totalorder %s10, 0
    %p72 = por %p70, %p71
    %p73 = scmp.ne.s32.totalorder %s65, %s67
    %p74 = scmp.eq.s32.totalorder %s15, 1
    %p75 = por %p73, %p74
    %p76 = scmp.ne.s32.totalorder %s67, %s68
    %p77 = scmp.eq.s32.totalorder %s15, 0
    %p78 = por %p76, %p77
    %p79 = scmp.ne.s32.totalorder %s67, %s68
    %p80 = scmp.eq.s32.totalorder %s16, 1
    %p81 = por %p79, %p80
    %p83 = scmp.ne.s32.totalorder %s68, %s82
    %p84 = scmp.eq.s32.totalorder %s16, 0
    %p85 = por %p83, %p84
    %s87 = sadd.s32 %s86, 1
    %p90 = scmp.eq.s32.totalorder %s10, 1
    %p91 = scmp.ne.s32.totalorder %s86, %s88
    %p92 = scmp.eq.s32.totalorder %s10, 0
    %p93 = por %p91, %p92
    %p94 = scmp.ne.s32.totalorder %s86, %s88
    %p95 = scmp.eq.s32.totalorder %s15, 1
    %p96 = por %p94, %p95
    %p97 = scmp.ne.s32.totalorder %s88, %s89
    %p98 = scmp.eq.s32.totalorder %s15, 0
    %p99 = por %p97, %p98
    %p100 = scmp.ne.s32.totalorder %s88, %s89
    %p101 = scmp.eq.s32.totalorder %s16, 1
    %p102 = por %p100, %p101
    %p104 = scmp.ne.s32.totalorder %s89, %s103
    %p105 = scmp.eq.s32.totalorder %s16, 0
    %p106 = por %p104, %p105
    %s107 = ssub.s32 %s10, %s17
    %p108 = scmp.eq.s32.totalorder %s107, 0
    %s110 = sadd.s32 %s109, 1
    %s111 = scalar_select %p108, %s109, %s110
    %p114 = pneg %p108
    %p115 = scmp.eq.s32.totalorder %s10, 1
    %p116 = por %p114, %p115
    %p117 = scmp.ne.s32.totalorder %s109, %s112
    %p118 = scmp.eq.s32.totalorder %s10, 0
    %p119 = por %p117, %p118
    %p120 = scmp.ne.s32.totalorder %s109, %s112
    %p121 = scmp.eq.s32.totalorder %s15, 1
    %p122 = por %p120, %p121
    %p123 = scmp.ne.s32.totalorder %s112, %s113
    %p124 = scmp.eq.s32.totalorder %s15, 0
    %p125 = por %p123, %p124
    %p126 = scmp.ne.s32.totalorder %s112, %s113
    %p127 = scmp.eq.s32.totalorder %s16, 1
    %p128 = por %p126, %p127
    %p130 = scmp.ne.s32.totalorder %s113, %s129
    %p131 = scmp.eq.s32.totalorder %s16, 0
    %p132 = por %p130, %p131
    %p133 = scmp.le.s32.totalorder 1, %s10
    %p134 = scmp.lt.s32.totalorder %s10, 3
    %p135 = pnand %p133, %p134
    %p136 = pneg %p135
    // Predicated region
    $region9: #{simsiam_forward.5} parent=5 // pred_check
      _
    $region10: #{simsiam_forward.5} parent=5 // pred_check_branch
      %138 = sbr.rel (%p135) target = $region12
    $region11: #{simsiam_forward.5} parent=5 // pred_region
      %s139 = ssub.s32 %s10, 1
      // Predicated region
      $region13: #{simsiam_forward.5} parent=11 // pred_check
        %p140 = pneg %p57
      $region14: #{simsiam_forward.5} parent=11 // pred_check_branch
        %142 = sbr.rel (%p140) target = $region16
      $region15: #{simsiam_forward.5} parent=11 // pred_region
        _
      $region16: #{simsiam_forward.5} parent=11 // pred_fallthru
        _
      // Predicated region
      $region17: #{simsiam_forward.5} parent=11 // pred_check
        %p143 = pneg %p78
      $region18: #{simsiam_forward.5} parent=11 // pred_check_branch
        %145 = sbr.rel (%p143) target = $region20
      $region19: #{simsiam_forward.5} parent=11 // pred_region
        _
      $region20: #{simsiam_forward.5} parent=11 // pred_fallthru
        _
      // Predicated region
      $region21: #{simsiam_forward.5} parent=11 // pred_check
        %p146 = pneg %p99
      $region22: #{simsiam_forward.5} parent=11 // pred_check_branch
        %148 = sbr.rel (%p146) target = $region24
      $region23: #{simsiam_forward.5} parent=11 // pred_region
        _
      $region24: #{simsiam_forward.5} parent=11 // pred_fallthru
        _
    $region12: #{simsiam_forward.5} parent=5 // pred_fallthru
      _
    %p149 = scmp.lt.s32.totalorder %s10, 2
    // Predicated region
    $region25: #{simsiam_forward.5} parent=5 // pred_check
      %p150 = pneg %p149
    $region26: #{simsiam_forward.5} parent=5 // pred_check_branch
      %152 = sbr.rel (%p150) target = $region28
    $region27: #{simsiam_forward.5} parent=5 // pred_region
      // Predicated region
      $region29: #{simsiam_forward.5} parent=27 // pred_check
        %p153 = pneg %p30
      $region30: #{simsiam_forward.5} parent=27 // pred_check_branch
        %155 = sbr.rel (%p153) target = $region32
      $region31: #{simsiam_forward.5} parent=27 // pred_region
        %s156 = smul.u32 2, %s10
        %p157 = scmp.lt.s32.totalorder %s156, 3
        %s158 = scalar_select %p157, %s156, 3
        %s159 = smul.addr %s158, 4
        %s160 = smul.addr %s159, 4
        %s161 = scalar_lea.vmem %s0, %s160
        %s162 = smul.u32 2, %s10
      $region32: #{simsiam_forward.5} parent=27 // pred_fallthru
        _
    $region28: #{simsiam_forward.5} parent=5 // pred_fallthru
      _
    %p163 = scmp.le.s32.totalorder 1, %s10
    %p164 = scmp.lt.s32.totalorder %s10, 3
    %p165 = pnand %p163, %p164
    %p166 = pneg %p165
    // Predicated region
    $region33: #{simsiam_forward.5} parent=5 // pred_check
      _
    $region34: #{simsiam_forward.5} parent=5 // pred_check_branch
      %168 = sbr.rel (%p165) target = $region36
    $region35: #{simsiam_forward.5} parent=5 // pred_region
      %s169 = ssub.s32 %s10, 1
      %s170 = smul.u32 2, %s15
      %p171 = scmp.lt.s32.totalorder %s170, 3
      %s172 = scalar_select %p171, %s170, 3
      %s173 = smul.addr %s172, 4
      %s174 = smul.addr %s173, 4
      %s175 = scalar_lea.vmem %s0, %s174
      %p176 = pneg %p36
      %p177 = pneg %p33
      %p178 = pneg %p57
      %p179 = pneg %p54
      %p180 = pneg %p78
      %p181 = pneg %p75
      %p182 = pneg %p99
      %p183 = pneg %p96
      %p184 = pneg %p125
      %p185 = pneg %p122
      %p186 = scmp.lt.s32.totalorder %s15, 1
      %s187 = scalar_select %p186, %s15, 1
      %s188 = smul.addr %s187, 4
      %s189 = smul.addr %s188, 2
      %s190 = scalar_lea.vmem %s4, %s189
      %s191 = smul.u32 2, %s15
      %p192 = scmp.lt.s32.totalorder %s191, 3
      %s193 = scalar_select %p192, %s191, 3
      %s194 = smul.addr %s193, 4
      %s195 = smul.addr %s194, 4
      %s196 = scalar_lea.vmem %s0, %s195
      %s197 = smul.u32 2, %s15
      %p198 = scmp.lt.s32.totalorder %s15, 1
      %s199 = scalar_select %p198, %s15, 1
      %s200 = smul.addr %s199, 4
      %s201 = smul.addr %s200, 2
      %s202 = scalar_lea.vmem %s4, %s201
      %v203 = vld [vmem:[%s196] sm:$0xff]
      %v204 = vld [vmem:[%s196 + $0x8] sm:$0xff]
      %v205 = vld [vmem:[%s196 + $0x10] sm:$0xff]
      %v206 = vld [vmem:[%s196 + $0x18] sm:$0xff]
      %v207 = vunpack.c.l.bf16 %v203
      %v208 = vunpack.c.h.bf16 %v203
      %v209 = vunpack.c.l.bf16 %v204
      %v210 = vunpack.c.h.bf16 %v204
      %v211 = vunpack.c.l.bf16 %v205
      %v212 = vunpack.c.h.bf16 %v205
      %v213 = vunpack.c.l.bf16 %v206
      %v214 = vunpack.c.h.bf16 %v206
      %v215 = vadd.f32 %v207, %v209
      %v216 = vrot.slane %v215, 4
      %v217 = vadd.f32 %v215, %v216
      %v218 = vrot.slane %v217, 2
      %v219 = vadd.f32 %v217, %v218
      %v220 = vrot.slane %v219, 1
      %v221 = vadd.f32 %v219, %v220
      %v222 = vadd.f32 %v208, %v210
      %v223 = vrot.slane %v222, 4
      %v224 = vadd.f32 %v222, %v223
      %v225 = vrot.slane %v224, 2
      %v226 = vadd.f32 %v224, %v225
      %v227 = vrot.slane %v226, 1
      %v228 = vadd.f32 %v226, %v227
      %v229 = vadd.f32 %v211, %v213
      %v230 = vrot.slane %v229, 4
      %v231 = vadd.f32 %v229, %v230
      %v232 = vrot.slane %v231, 2
      %v233 = vadd.f32 %v231, %v232
      %v234 = vrot.slane %v233, 1
      %v235 = vadd.f32 %v233, %v234
      %v236 = vadd.f32 %v212, %v214
      %v237 = vrot.slane %v236, 4
      %v238 = vadd.f32 %v236, %v237
      %v239 = vrot.slane %v238, 2
      %v240 = vadd.f32 %v238, %v239
      %v241 = vrot.slane %v240, 1
      %v242 = vadd.f32 %v240, %v241
      %v243 = vmul.f32 %v221, 0.0625
      %v244 = vmul.f32 %v228, 0.0625
      %v245 = vmul.f32 %v235, 0.0625
      %v246 = vmul.f32 %v242, 0.0625
      %v247 = vld [vmem:[%s1] sm:$0xff]
      %v248 = vld [vmem:[%s1 + $0x8] sm:$0xff]
      %v249 = vld [vmem:[%s1 + $0x10] sm:$0xff]
      %v250 = vld [vmem:[%s1 + $0x18] sm:$0xff]
      %v251 = vld [vmem:[%s1 + $0x20] sm:$0xff]
      %v252 = vld [vmem:[%s1 + $0x28] sm:$0xff]
      %v253 = vld [vmem:[%s1 + $0x30] sm:$0xff]
      %v254 = vld [vmem:[%s1 + $0x38] sm:$0xff]
      %v255 = vld [vmem:[%s1 + $0x40] sm:$0xff]
      %v256 = vld [vmem:[%s1 + $0x48] sm:$0xff]
      %v257 = vld [vmem:[%s1 + $0x50] sm:$0xff]
      %v258 = vld [vmem:[%s1 + $0x58] sm:$0xff]
      %v259 = vld [vmem:[%s1 + $0x60] sm:$0xff]
      %v260 = vld [vmem:[%s1 + $0x68] sm:$0xff]
      %v261 = vld [vmem:[%s1 + $0x70] sm:$0xff]
      %v262 = vld [vmem:[%s1 + $0x78] sm:$0xff]
      %v263 = vld [vmem:[%s1 + $0x80] sm:$0xff]
      %v264 = vld [vmem:[%s1 + $0x88] sm:$0xff]
      %v265 = vld [vmem:[%s1 + $0x90] sm:$0xff]
      %v266 = vld [vmem:[%s1 + $0x98] sm:$0xff]
      %v267 = vld [vmem:[%s1 + $0xa0] sm:$0xff]
      %v268 = vld [vmem:[%s1 + $0xa8] sm:$0xff]
      %v269 = vld [vmem:[%s1 + $0xb0] sm:$0xff]
      %v270 = vld [vmem:[%s1 + $0xb8] sm:$0xff]
      %v271 = vld [vmem:[%s1 + $0xc0] sm:$0xff]
      %v272 = vld [vmem:[%s1 + $0xc8] sm:$0xff]
      %v273 = vld [vmem:[%s1 + $0xd0] sm:$0xff]
      %v274 = vld [vmem:[%s1 + $0xd8] sm:$0xff]
      %v275 = vld [vmem:[%s1 + $0xe0] sm:$0xff]
      %v276 = vld [vmem:[%s1 + $0xe8] sm:$0xff]
      %v277 = vld [vmem:[%s1 + $0xf0] sm:$0xff]
      %v278 = vld [vmem:[%s1 + $0xf8] sm:$0xff]
      %v279 = vld [vmem:[%s1 + $0x100] sm:$0xff]
      %v280 = vld [vmem:[%s1 + $0x108] sm:$0xff]
      %v281 = vld [vmem:[%s1 + $0x110] sm:$0xff]
      %v282 = vld [vmem:[%s1 + $0x118] sm:$0xff]
      %v283 = vld [vmem:[%s1 + $0x120] sm:$0xff]
      %v284 = vld [vmem:[%s1 + $0x128] sm:$0xff]
      %v285 = vld [vmem:[%s1 + $0x130] sm:$0xff]
      %v286 = vld [vmem:[%s1 + $0x138] sm:$0xff]
      %v287 = vld [vmem:[%s1 + $0x140] sm:$0xff]
      %v288 = vld [vmem:[%s1 + $0x148] sm:$0xff]
      %v289 = vld [vmem:[%s1 + $0x150] sm:$0xff]
      %v290 = vld [vmem:[%s1 + $0x158] sm:$0xff]
      %v291 = vld [vmem:[%s1 + $0x160] sm:$0xff]
      %v292 = vld [vmem:[%s1 + $0x168] sm:$0xff]
      %v293 = vld [vmem:[%s1 + $0x170] sm:$0xff]
      %v294 = vld [vmem:[%s1 + $0x178] sm:$0xff]
      %v295 = vld [vmem:[%s1 + $0x180] sm:$0xff]
      %v296 = vld [vmem:[%s1 + $0x188] sm:$0xff]
      %v297 = vld [vmem:[%s1 + $0x190] sm:$0xff]
      %v298 = vld [vmem:[%s1 + $0x198] sm:$0xff]
      %v299 = vld [vmem:[%s1 + $0x1a0] sm:$0xff]
      %v300 = vld [vmem:[%s1 + $0x1a8] sm:$0xff]
      %v301 = vld [vmem:[%s1 + $0x1b0] sm:$0xff]
      %v302 = vld [vmem:[%s1 + $0x1b8] sm:$0xff]
      %v303 = vld [vmem:[%s1 + $0x1c0] sm:$0xff]
      %v304 = vld [vmem:[%s1 + $0x1c8] sm:$0xff]
      %v305 = vld [vmem:[%s1 + $0x1d0] sm:$0xff]
      %v306 = vld [vmem:[%s1 + $0x1d8] sm:$0xff]
      %v307 = vld [vmem:[%s1 + $0x1e0] sm:$0xff]
      %v308 = vld [vmem:[%s1 + $0x1e8] sm:$0xff]
      %v309 = vld [vmem:[%s1 + $0x1f0] sm:$0xff]
      %v310 = vld [vmem:[%s1 + $0x1f8] sm:$0xff]
      %v311 = vld [vmem:[%s2] sm:$0xff]
      %v312 = vld [vmem:[%s2 + $0x8] sm:$0xff]
      %v313 = vld [vmem:[%s2 + $0x10] sm:$0xff]
      %v314 = vld [vmem:[%s2 + $0x18] sm:$0xff]
      %v315 = vld [vmem:[%s2 + $0x20] sm:$0xff]
      %v316 = vld [vmem:[%s2 + $0x28] sm:$0xff]
      %v317 = vld [vmem:[%s2 + $0x30] sm:$0xff]
      %v318 = vld [vmem:[%s2 + $0x38] sm:$0xff]
      %v319 = vld [vmem:[%s2 + $0x40] sm:$0xff]
      %v320 = vld [vmem:[%s2 + $0x48] sm:$0xff]
      %v321 = vld [vmem:[%s2 + $0x50] sm:$0xff]
      %v322 = vld [vmem:[%s2 + $0x58] sm:$0xff]
      %v323 = vld [vmem:[%s2 + $0x60] sm:$0xff]
      %v324 = vld [vmem:[%s2 + $0x68] sm:$0xff]
      %v325 = vld [vmem:[%s2 + $0x70] sm:$0xff]
      %v326 = vld [vmem:[%s2 + $0x78] sm:$0xff]
      %v327 = vld [vmem:[%s2 + $0x80] sm:$0xff]
      %v328 = vld [vmem:[%s2 + $0x88] sm:$0xff]
      %v329 = vld [vmem:[%s2 + $0x90] sm:$0xff]
      %v330 = vld [vmem:[%s2 + $0x98] sm:$0xff]
      %v331 = vld [vmem:[%s2 + $0xa0] sm:$0xff]
      %v332 = vld [vmem:[%s2 + $0xa8] sm:$0xff]
      %v333 = vld [vmem:[%s2 + $0xb0] sm:$0xff]
      %v334 = vld [vmem:[%s2 + $0xb8] sm:$0xff]
      %v335 = vld [vmem:[%s2 + $0xc0] sm:$0xff]
      %v336 = vld [vmem:[%s2 + $0xc8] sm:$0xff]
      %v337 = vld [vmem:[%s2 + $0xd0] sm:$0xff]
      %v338 = vld [vmem:[%s2 + $0xd8] sm:$0xff]
      %v339 = vld [vmem:[%s2 + $0xe0] sm:$0xff]
      %v340 = vld [vmem:[%s2 + $0xe8] sm:$0xff]
      %v341 = vld [vmem:[%s2 + $0xf0] sm:$0xff]
      %v342 = vld [vmem:[%s2 + $0xf8] sm:$0xff]
      %v343 = vld [vmem:[%s2 + $0x100] sm:$0xff]
      %v344 = vld [vmem:[%s2 + $0x108] sm:$0xff]
      %v345 = vld [vmem:[%s2 + $0x110] sm:$0xff]
      %v346 = vld [vmem:[%s2 + $0x118] sm:$0xff]
      %v347 = vld [vmem:[%s2 + $0x120] sm:$0xff]
      %v348 = vld [vmem:[%s2 + $0x128] sm:$0xff]
      %v349 = vld [vmem:[%s2 + $0x130] sm:$0xff]
      %v350 = vld [vmem:[%s2 + $0x138] sm:$0xff]
      %v351 = vld [vmem:[%s2 + $0x140] sm:$0xff]
      %v352 = vld [vmem:[%s2 + $0x148] sm:$0xff]
      %v353 = vld [vmem:[%s2 + $0x150] sm:$0xff]
      %v354 = vld [vmem:[%s2 + $0x158] sm:$0xff]
      %v355 = vld [vmem:[%s2 + $0x160] sm:$0xff]
      %v356 = vld [vmem:[%s2 + $0x168] sm:$0xff]
      %v357 = vld [vmem:[%s2 + $0x170] sm:$0xff]
      %v358 = vld [vmem:[%s2 + $0x178] sm:$0xff]
      %v359 = vld [vmem:[%s2 + $0x180] sm:$0xff]
      %v360 = vld [vmem:[%s2 + $0x188] sm:$0xff]
      %v361 = vld [vmem:[%s2 + $0x190] sm:$0xff]
      %v362 = vld [vmem:[%s2 + $0x198] sm:$0xff]
      %v363 = vld [vmem:[%s2 + $0x1a0] sm:$0xff]
      %v364 = vld [vmem:[%s2 + $0x1a8] sm:$0xff]
      %v365 = vld [vmem:[%s2 + $0x1b0] sm:$0xff]
      %v366 = vld [vmem:[%s2 + $0x1b8] sm:$0xff]
      %v367 = vld [vmem:[%s2 + $0x1c0] sm:$0xff]
      %v368 = vld [vmem:[%s2 + $0x1c8] sm:$0xff]
      %v369 = vld [vmem:[%s2 + $0x1d0] sm:$0xff]
      %v370 = vld [vmem:[%s2 + $0x1d8] sm:$0xff]
      %v371 = vld [vmem:[%s2 + $0x1e0] sm:$0xff]
      %v372 = vld [vmem:[%s2 + $0x1e8] sm:$0xff]
      %v373 = vld [vmem:[%s2 + $0x1f0] sm:$0xff]
      %v374 = vld [vmem:[%s2 + $0x1f8] sm:$0xff]
      %v375 = vld [vmem:[%s3] sm:$0x3]
      %vm380 = vcmask 1041409
      %v381 = vsel %vm380, %v245, %v243
      %v382 = vsel %vm380, %v246, %v244
      %385 = vmatprep.subr.mxu0 %v278
      %386 = vmatpush1.msra.mxu0 %v277
      %387 = vmatprep.subr.mxu0 %v276
      %388 = vmatpush1.msra.mxu0 %v275
      %389 = vmatprep.subr.mxu0 %v274
      %390 = vmatpush1.msra.mxu0 %v273
      %391 = vmatprep.subr.mxu0 %v272
      %392 = vmatpush1.msra.mxu0 %v271
      %393 = vmatprep.subr.mxu0 %v270
      %394 = vmatpush1.msra.mxu0 %v269
      %395 = vmatprep.subr.mxu0 %v268
      %396 = vmatpush1.msra.mxu0 %v267
      %397 = vmatprep.subr.mxu0 %v266
      %398 = vmatpush1.msra.mxu0 %v265
      %399 = vmatprep.subr.mxu0 %v264
      %400 = vmatpush1.msra.mxu0 %v263
      %401 = vmatprep.subr.mxu0 %v262
      %402 = vmatpush1.msra.mxu0 %v261
      %403 = vmatprep.subr.mxu0 %v260
      %404 = vmatpush1.msra.mxu0 %v259
      %405 = vmatprep.subr.mxu0 %v258
      %406 = vmatpush1.msra.mxu0 %v257
      %407 = vmatprep.subr.mxu0 %v256
      %408 = vmatpush1.msra.mxu0 %v255
      %409 = vmatprep.subr.mxu0 %v254
      %410 = vmatpush1.msra.mxu0 %v253
      %411 = vmatprep.subr.mxu0 %v252
      %412 = vmatpush1.msra.mxu0 %v251
      %413 = vmatprep.subr.mxu0 %v250
      %414 = vmatpush1.msra.mxu0 %v249
      %415 = vmatprep.subr.mxu0 %v248
      %416 = vmatpush1.msra.mxu0 %v247
      %417 = vmatprep.subr.mxu0 %v310
      %418 = vmatpush2.msra.mxu0 %v309
      %419 = vmatprep.subr.mxu0 %v308
      %420 = vmatpush2.msra.mxu0 %v307
      %421 = vmatprep.subr.mxu0 %v306
      %422 = vmatpush2.msra.mxu0 %v305
      %423 = vmatprep.subr.mxu0 %v304
      %424 = vmatpush2.msra.mxu0 %v303
      %425 = vmatprep.subr.mxu0 %v302
      %426 = vmatpush2.msra.mxu0 %v301
      %427 = vmatprep.subr.mxu0 %v300
      %428 = vmatpush2.msra.mxu0 %v299
      %429 = vmatprep.subr.mxu0 %v298
      %430 = vmatpush2.msra.mxu0 %v297
      %431 = vmatprep.subr.mxu0 %v296
      %432 = vmatpush2.msra.mxu0 %v295
      %433 = vmatprep.subr.mxu0 %v294
      %434 = vmatpush2.msra.mxu0 %v293
      %435 = vmatprep.subr.mxu0 %v292
      %436 = vmatpush2.msra.mxu0 %v291
      %437 = vmatprep.subr.mxu0 %v290
      %438 = vmatpush2.msra.mxu0 %v289
      %439 = vmatprep.subr.mxu0 %v288
      %440 = vmatpush2.msra.mxu0 %v287
      %441 = vmatprep.subr.mxu0 %v286
      %442 = vmatpush2.msra.mxu0 %v285
      %443 = vmatprep.subr.mxu0 %v284
      %444 = vmatpush2.msra.mxu0 %v283
      %445 = vmatprep.subr.mxu0 %v282
      %446 = vmatpush2.msra.mxu0 %v281
      %447 = vmatprep.subr.mxu0 %v280
      %448 = vmatpush2.msra.mxu0 %v279
      %449 = vmatprep.mubr.f32.mxu0 %v382
      %450 = vmatmul.mubr.f32.gmra.mxu0 %v381
      %v451 = vpop.f32.mrf.mxu0
      %v452 = vadd.f32 0.0, %v451
      %v453 = vpop.f32.mrf.mxu0
      %v454 = vadd.f32 0.0, %v453
      %455 = vdwg.mxu0
      %vm456 = vcmp.gt.f32.partialorder %v452, 0.0
      %vm457 = vcmp.gt.f32.partialorder %v454, 0.0
      %v458 = vmul.f32 %v452, 0.01
      %v459 = vmul.f32 %v454, 0.01
      %v460 = vsel %vm456, %v452, %v458
      %v461 = vsel %vm457, %v454, %v459
      %v463 = vlaneseq
      %v464 = vshrl.u32 %v463, 7
      %v465 = vsub.s32 0, %v464
      %v466 = vrot.slane %v375, %v465
      %v467 = vlaneseq
      %v468 = vshrl.u32 %v467, 7
      %v469 = vsub.s32 1, %v468
      %v470 = vrot.slane %v375, %v469
      %473 = vmatprep.subr.mxu0 %v342
      %474 = vmatpush1.msra.mxu0 %v341
      %475 = vmatprep.subr.mxu0 %v340
      %476 = vmatpush1.msra.mxu0 %v339
      %477 = vmatprep.subr.mxu0 %v338
      %478 = vmatpush1.msra.mxu0 %v337
      %479 = vmatprep.subr.mxu0 %v336
      %480 = vmatpush1.msra.mxu0 %v335
      %481 = vmatprep.subr.mxu0 %v334
      %482 = vmatpush1.msra.mxu0 %v333
      %483 = vmatprep.subr.mxu0 %v332
      %484 = vmatpush1.msra.mxu0 %v331
      %485 = vmatprep.subr.mxu0 %v330
      %486 = vmatpush1.msra.mxu0 %v329
      %487 = vmatprep.subr.mxu0 %v328
      %488 = vmatpush1.msra.mxu0 %v327
      %489 = vmatprep.subr.mxu0 %v326
      %490 = vmatpush1.msra.mxu0 %v325
      %491 = vmatprep.subr.mxu0 %v324
      %492 = vmatpush1.msra.mxu0 %v323
      %493 = vmatprep.subr.mxu0 %v322
      %494 = vmatpush1.msra.mxu0 %v321
      %495 = vmatprep.subr.mxu0 %v320
      %496 = vmatpush1.msra.mxu0 %v319
      %497 = vmatprep.subr.mxu0 %v318
      %498 = vmatpush1.msra.mxu0 %v317
      %499 = vmatprep.subr.mxu0 %v316
      %500 = vmatpush1.msra.mxu0 %v315
      %501 = vmatprep.subr.mxu0 %v314
      %502 = vmatpush1.msra.mxu0 %v313
      %503 = vmatprep.subr.mxu0 %v312
      %504 = vmatpush1.msra.mxu0 %v311
      %505 = vmatprep.subr.mxu0 %v374
      %506 = vmatpush2.msra.mxu0 %v373
      %507 = vmatprep.subr.mxu0 %v372
      %508 = vmatpush2.msra.mxu0 %v371
      %509 = vmatprep.subr.mxu0 %v370
      %510 = vmatpush2.msra.mxu0 %v369
      %511 = vmatprep.subr.mxu0 %v368
      %512 = vmatpush2.msra.mxu0 %v367
      %513 = vmatprep.subr.mxu0 %v366
      %514 = vmatpush2.msra.mxu0 %v365
      %515 = vmatprep.subr.mxu0 %v364
      %516 = vmatpush2.msra.mxu0 %v363
      %517 = vmatprep.subr.mxu0 %v362
      %518 = vmatpush2.msra.mxu0 %v361
      %519 = vmatprep.subr.mxu0 %v360
      %520 = vmatpush2.msra.mxu0 %v359
      %521 = vmatprep.subr.mxu0 %v358
      %522 = vmatpush2.msra.mxu0 %v357
      %523 = vmatprep.subr.mxu0 %v356
      %524 = vmatpush2.msra.mxu0 %v355
      %525 = vmatprep.subr.mxu0 %v354
      %526 = vmatpush2.msra.mxu0 %v353
      %527 = vmatprep.subr.mxu0 %v352
      %528 = vmatpush2.msra.mxu0 %v351
      %529 = vmatprep.subr.mxu0 %v350
      %530 = vmatpush2.msra.mxu0 %v349
      %531 = vmatprep.subr.mxu0 %v348
      %532 = vmatpush2.msra.mxu0 %v347
      %533 = vmatprep.subr.mxu0 %v346
      %534 = vmatpush2.msra.mxu0 %v345
      %535 = vmatprep.subr.mxu0 %v344
      %536 = vmatpush2.msra.mxu0 %v343
      %537 = vmatprep.mubr.f32.mxu0 %v461
      %538 = vmatmul.mubr.f32.gmra.mxu0 %v460
      %v539 = vpop.f32.mrf.mxu0
      %v540 = vadd.f32 %v466, %v539
      %v541 = vpop.f32.mrf.mxu0
      %v542 = vadd.f32 %v470, %v541
      %543 = vdwg.mxu0
      %v546 = vcombine.low %v540, %v542
      %v548 = vunpack.c.l.s4 1983009808
      %v549 = vunpack.c.0.s8 %v548
      %v550 = vlaneseq
      %v551 = vshrl.u32 %v550, 7
      %v552 = vsub.s32 %v549, %v551
      %v553 = vrot.slane %v546, %v552
      %555 = vst [vmem:[%s202] sm:$0xf] %v553
      %v556 = vcombine.low %v243, %v244
      %v558 = vunpack.c.l.s4 1983009808
      %v559 = vunpack.c.0.s8 %v558
      %v560 = vlaneseq
      %v561 = vshrl.u32 %v560, 7
      %v562 = vsub.s32 %v559, %v561
      %v563 = vrot.slane %v556, %v562
      %v564 = vcombine.low %v245, %v246
      %v566 = vunpack.c.l.s4 1983009808
      %v567 = vunpack.c.0.s8 %v566
      %v568 = vlaneseq
      %v569 = vshrl.u32 %v568, 7
      %v570 = vsub.s32 %v567, %v569
      %v571 = vrot.slane %v564, %v570
      %vm572 = vcmask 1044484
      %v573 = vsel %vm572, %v563, %v563
      %vm574 = vcmask 1046534
      %v575 = vsel %vm574, %v563, %v573
      %v576 = vrot.slane %v571, 7
      %v577 = vsel %vm380, %v576, %v575
      %vm578 = vcmask 1043459
      %v579 = vsel %vm578, %v576, %v577
      %vm580 = vcmask 1045509
      %v581 = vsel %vm580, %v576, %v579
      %vm582 = vcmask 1047559
      %v583 = vsel %vm582, %v576, %v581
      %585 = vst [vmem:[%s202 + $0x4] sm:$0xf] %v583
      %p586 = scmp.lt.s32.totalorder %s15, 1
      %s587 = scalar_select %p586, %s15, 1
      %s588 = smul.addr %s587, 4
      %s589 = smul.addr %s588, 2
      %s590 = scalar_lea.vmem %s4, %s589
      // Predicated region
      $region37: #{simsiam_forward.5} parent=35 // pred_check
        %p591 = pneg %p122
      $region38: #{simsiam_forward.5} parent=35 // pred_check_branch
        %593 = sbr.rel (%p591) target = $region40
      $region39: #{simsiam_forward.5} parent=35 // pred_region
        _
      $region40: #{simsiam_forward.5} parent=35 // pred_fallthru
        _
    $region36: #{simsiam_forward.5} parent=5 // pred_fallthru
      _
    %p594 = scmp.le.s32.totalorder 2, %s10
    // Predicated region
    $region41: #{simsiam_forward.5} parent=5 // pred_check
      %p595 = pneg %p594
    $region42: #{simsiam_forward.5} parent=5 // pred_check_branch
      %597 = sbr.rel (%p595) target = $region44
    $region43: #{simsiam_forward.5} parent=5 // pred_region
      %s598 = ssub.s32 %s10, 2
      // Predicated region
      $region45: #{simsiam_forward.5} parent=43 // pred_check
        %p599 = pneg %p128
      $region46: #{simsiam_forward.5} parent=43 // pred_check_branch
        %601 = sbr.rel (%p599) target = $region48
      $region47: #{simsiam_forward.5} parent=43 // pred_region
        %p602 = scmp.lt.s32.totalorder %s16, 1
        %s603 = scalar_select %p602, %s16, 1
        %s604 = smul.addr %s603, 4
        %s605 = smul.addr %s604, 2
        %s606 = scalar_lea.vmem %s4, %s605
      $region48: #{simsiam_forward.5} parent=43 // pred_fallthru
        _
    $region44: #{simsiam_forward.5} parent=5 // pred_fallthru
      _
  $region6: #{simsiam_forward.5} parent=0 // loop_footer
    %s14 = sadd.s32 1, %s10
  $region7: #{simsiam_forward.5} parent=0 // loop_footer_branch
    %9 = sbr.rel target = $region3
  $region8: #{simsiam_forward.5} parent=0 // loop_exit
    _

// kernel: simsiam_forward.3
$region0: #{simsiam_forward.3}
  #allocation0 [shape = 'u32[]', space=smem, size = 0x4, offset = 0x4, fixed_abs, tag = 'smem constant byte address 0x4 - core index']
  #allocation1 [shape = 'u32[144,128]{1,0:T(1,128)}', space=vmem, size = 0x12000, scoped, tag = 'internal scratch']
  %s0 = inlined_call_operand.vmem [shape: bf16[4,128,128], index: 0, kind: input, shape index: {}]
  %s1 = inlined_call_operand.vmem [shape: f32[64,64], index: 1, kind: input, shape index: {}]
  %s2 = inlined_call_operand.vmem [shape: f32[64,64], index: 2, kind: input, shape index: {}]
  %s3 = inlined_call_operand.vmem [shape: f32[1,64], index: 3, kind: input, shape index: {}]
  %s4 = inlined_call_operand.vmem [shape: f32[2,2,128], index: 4, kind: output, shape index: {}]
  %s5 = sld [smem:[#allocation0]]
  $region49: #{simsiam_forward.3} parent=0
    _
  %s7 = ssub.s32 1, %s5
  %s8 = scalar_select 0, %s7, %s5
  loop: start=0, step=1, limit=4
  $region2: #{simsiam_forward.3} parent=0 // loop_pre_header
    _
  $region3: #{simsiam_forward.3} parent=0 // loop_header
    %s10 = sphi 0, %s14
    %p11 = scmp.ge.s32.totalorder %s10, 4
    %s20 = sphi 0, %s22
    %s23 = sphi 0, %s20
    %s24 = sphi 0, %s23
    %s40 = sphi 0, %s24
    %s44 = sphi 0, %s44
    %s46 = sphi 0, %s44
    %s47 = sphi 0, %s46
    %s61 = sphi 0, %s47
    %s65 = sphi 0, %s65
    %s67 = sphi 0, %s65
    %s68 = sphi 0, %s67
    %s82 = sphi 0, %s68
    %s86 = sphi 0, %s86
    %s88 = sphi 0, %s86
    %s89 = sphi 0, %s88
    %s103 = sphi 0, %s89
    %s109 = sphi 0, %s111
    %s112 = sphi 0, %s109
    %s113 = sphi 0, %s112
    %s129 = sphi 0, %s113
  $region4: #{simsiam_forward.3} parent=0 // loop_header_branch
    %13 = sbr.rel (%p11) target = $region8
  $region5: #{simsiam_forward.3} parent=0 // loop_body
    %s15 = ssub.s32 %s10, 1
    %s16 = ssub.s32 %s10, 2
    %s17 = sadd.s32 %s10, 1
    %s18 = ssub.s32 %s10, %s17
    %p19 = scmp.eq.s32.totalorder %s18, 0
    %s21 = sadd.s32 %s20, 1
    %s22 = scalar_select %p19, %s20, %s21
    %p25 = pneg %p19
    %p26 = scmp.eq.s32.totalorder %s10, 1
    %p27 = por %p25, %p26
    %p28 = scmp.ne.s32.totalorder %s20, %s23
    %p29 = scmp.eq.s32.totalorder %s10, 0
    %p30 = por %p28, %p29
    %p31 = scmp.ne.s32.totalorder %s20, %s23
    %p32 = scmp.eq.s32.totalorder %s15, 1
    %p33 = por %p31, %p32
    %p34 = scmp.ne.s32.totalorder %s23, %s24
    %p35 = scmp.eq.s32.totalorder %s15, 0
    %p36 = por %p34, %p35
    %p37 = scmp.ne.s32.totalorder %s23, %s24
    %p38 = scmp.eq.s32.totalorder %s16, 1
    %p39 = por %p37, %p38
    %p41 = scmp.ne.s32.totalorder %s24, %s40
    %p42 = scmp.eq.s32.totalorder %s16, 0
    %p43 = por %p41, %p42
    %s45 = sadd.s32 %s44, 1
    %p48 = scmp.eq.s32.totalorder %s10, 1
    %p49 = scmp.ne.s32.totalorder %s44, %s46
    %p50 = scmp.eq.s32.totalorder %s10, 0
    %p51 = por %p49, %p50
    %p52 = scmp.ne.s32.totalorder %s44, %s46
    %p53 = scmp.eq.s32.totalorder %s15, 1
    %p54 = por %p52, %p53
    %p55 = scmp.ne.s32.totalorder %s46, %s47
    %p56 = scmp.eq.s32.totalorder %s15, 0
    %p57 = por %p55, %p56
    %p58 = scmp.ne.s32.totalorder %s46, %s47
    %p59 = scmp.eq.s32.totalorder %s16, 1
    %p60 = por %p58, %p59
    %p62 = scmp.ne.s32.totalorder %s47, %s61
    %p63 = scmp.eq.s32.totalorder %s16, 0
    %p64 = por %p62, %p63
    %s66 = sadd.s32 %s65, 1
    %p69 = scmp.eq.s32.totalorder %s10, 1
    %p70 = scmp.ne.s32.totalorder %s65, %s67
    %p71 = scmp.eq.s32.totalorder %s10, 0
    %p72 = por %p70, %p71
    %p73 = scmp.ne.s32.totalorder %s65, %s67
    %p74 = scmp.eq.s32.totalorder %s15, 1
    %p75 = por %p73, %p74
    %p76 = scmp.ne.s32.totalorder %s67, %s68
    %p77 = scmp.eq.s32.totalorder %s15, 0
    %p78 = por %p76, %p77
    %p79 = scmp.ne.s32.totalorder %s67, %s68
    %p80 = scmp.eq.s32.totalorder %s16, 1
    %p81 = por %p79, %p80
    %p83 = scmp.ne.s32.totalorder %s68, %s82
    %p84 = scmp.eq.s32.totalorder %s16, 0
    %p85 = por %p83, %p84
    %s87 = sadd.s32 %s86, 1
    %p90 = scmp.eq.s32.totalorder %s10, 1
    %p91 = scmp.ne.s32.totalorder %s86, %s88
    %p92 = scmp.eq.s32.totalorder %s10, 0
    %p93 = por %p91, %p92
    %p94 = scmp.ne.s32.totalorder %s86, %s88
    %p95 = scmp.eq.s32.totalorder %s15, 1
    %p96 = por %p94, %p95
    %p97 = scmp.ne.s32.totalorder %s88, %s89
    %p98 = scmp.eq.s32.totalorder %s15, 0
    %p99 = por %p97, %p98
    %p100 = scmp.ne.s32.totalorder %s88, %s89
    %p101 = scmp.eq.s32.totalorder %s16, 1
    %p102 = por %p100, %p101
    %p104 = scmp.ne.s32.totalorder %s89, %s103
    %p105 = scmp.eq.s32.totalorder %s16, 0
    %p106 = por %p104, %p105
    %s107 = ssub.s32 %s10, %s17
    %p108 = scmp.eq.s32.totalorder %s107, 0
    %s110 = sadd.s32 %s109, 1
    %s111 = scalar_select %p108, %s109, %s110
    %p114 = pneg %p108
    %p115 = scmp.eq.s32.totalorder %s10, 1
    %p116 = por %p114, %p115
    %p117 = scmp.ne.s32.totalorder %s109, %s112
    %p118 = scmp.eq.s32.totalorder %s10, 0
    %p119 = por %p117, %p118
    %p120 = scmp.ne.s32.totalorder %s109, %s112
    %p121 = scmp.eq.s32.totalorder %s15, 1
    %p122 = por %p120, %p121
    %p123 = scmp.ne.s32.totalorder %s112, %s113
    %p124 = scmp.eq.s32.totalorder %s15, 0
    %p125 = por %p123, %p124
    %p126 = scmp.ne.s32.totalorder %s112, %s113
    %p127 = scmp.eq.s32.totalorder %s16, 1
    %p128 = por %p126, %p127
    %p130 = scmp.ne.s32.totalorder %s113, %s129
    %p131 = scmp.eq.s32.totalorder %s16, 0
    %p132 = por %p130, %p131
    %p133 = scmp.le.s32.totalorder 1, %s10
    %p134 = scmp.lt.s32.totalorder %s10, 3
    %p135 = pnand %p133, %p134
    %p136 = pneg %p135
    // Predicated region
    $region9: #{simsiam_forward.3} parent=5 // pred_check
      _
    $region10: #{simsiam_forward.3} parent=5 // pred_check_branch
      %138 = sbr.rel (%p135) target = $region12
    $region11: #{simsiam_forward.3} parent=5 // pred_region
      %s139 = ssub.s32 %s10, 1
      // Predicated region
      $region13: #{simsiam_forward.3} parent=11 // pred_check
        %p140 = pneg %p57
      $region14: #{simsiam_forward.3} parent=11 // pred_check_branch
        %142 = sbr.rel (%p140) target = $region16
      $region15: #{simsiam_forward.3} parent=11 // pred_region
        _
      $region16: #{simsiam_forward.3} parent=11 // pred_fallthru
        _
      // Predicated region
      $region17: #{simsiam_forward.3} parent=11 // pred_check
        %p143 = pneg %p78
      $region18: #{simsiam_forward.3} parent=11 // pred_check_branch
        %145 = sbr.rel (%p143) target = $region20
      $region19: #{simsiam_forward.3} parent=11 // pred_region
        _
      $region20: #{simsiam_forward.3} parent=11 // pred_fallthru
        _
      // Predicated region
      $region21: #{simsiam_forward.3} parent=11 // pred_check
        %p146 = pneg %p99
      $region22: #{simsiam_forward.3} parent=11 // pred_check_branch
        %148 = sbr.rel (%p146) target = $region24
      $region23: #{simsiam_forward.3} parent=11 // pred_region
        _
      $region24: #{simsiam_forward.3} parent=11 // pred_fallthru
        _
    $region12: #{simsiam_forward.3} parent=5 // pred_fallthru
      _
    %p149 = scmp.lt.s32.totalorder %s10, 2
    // Predicated region
    $region25: #{simsiam_forward.3} parent=5 // pred_check
      %p150 = pneg %p149
    $region26: #{simsiam_forward.3} parent=5 // pred_check_branch
      %152 = sbr.rel (%p150) target = $region28
    $region27: #{simsiam_forward.3} parent=5 // pred_region
      // Predicated region
      $region29: #{simsiam_forward.3} parent=27 // pred_check
        %p153 = pneg %p30
      $region30: #{simsiam_forward.3} parent=27 // pred_check_branch
        %155 = sbr.rel (%p153) target = $region32
      $region31: #{simsiam_forward.3} parent=27 // pred_region
        %s156 = smul.u32 2, %s10
        %p157 = scmp.lt.s32.totalorder %s156, 3
        %s158 = scalar_select %p157, %s156, 3
        %s159 = smul.addr %s158, 16
        %s160 = smul.addr %s159, 4
        %s161 = scalar_lea.vmem %s0, %s160
        %s162 = smul.u32 2, %s10
      $region32: #{simsiam_forward.3} parent=27 // pred_fallthru
        _
    $region28: #{simsiam_forward.3} parent=5 // pred_fallthru
      _
    %p163 = scmp.le.s32.totalorder 1, %s10
    %p164 = scmp.lt.s32.totalorder %s10, 3
    %p165 = pnand %p163, %p164
    %p166 = pneg %p165
    // Predicated region
    $region33: #{simsiam_forward.3} parent=5 // pred_check
      _
    $region34: #{simsiam_forward.3} parent=5 // pred_check_branch
      %168 = sbr.rel (%p165) target = $region36
    $region35: #{simsiam_forward.3} parent=5 // pred_region
      %s169 = ssub.s32 %s10, 1
      %s170 = smul.u32 2, %s15
      %p171 = scmp.lt.s32.totalorder %s170, 3
      %s172 = scalar_select %p171, %s170, 3
      %s173 = smul.addr %s172, 16
      %s174 = smul.addr %s173, 4
      %s175 = scalar_lea.vmem %s0, %s174
      %p176 = pneg %p36
      %p177 = pneg %p33
      %p178 = pneg %p57
      %p179 = pneg %p54
      %p180 = pneg %p78
      %p181 = pneg %p75
      %p182 = pneg %p99
      %p183 = pneg %p96
      %p184 = pneg %p125
      %p185 = pneg %p122
      %p186 = scmp.lt.s32.totalorder %s15, 1
      %s187 = scalar_select %p186, %s15, 1
      %s188 = smul.addr %s187, 2
      %s189 = scalar_lea.vmem %s4, %s188
      %s190 = smul.u32 2, %s15
      %p191 = scmp.lt.s32.totalorder %s190, 3
      %s192 = scalar_select %p191, %s190, 3
      %s193 = smul.addr %s192, 16
      %s194 = smul.addr %s193, 4
      %s195 = scalar_lea.vmem %s0, %s194
      %s196 = smul.u32 2, %s15
      %p197 = scmp.lt.s32.totalorder %s15, 1
      %s198 = scalar_select %p197, %s15, 1
      %s199 = smul.addr %s198, 2
      %s200 = scalar_lea.vmem %s4, %s199
      %v201 = vld [vmem:[%s195] sm:$0xf]
      %v202 = vld [vmem:[%s195 + $0x4] sm:$0xf]
      %v203 = vld [vmem:[%s195 + $0x8] sm:$0xf]
      %v204 = vld [vmem:[%s195 + $0xc] sm:$0xf]
      %v205 = vld [vmem:[%s195 + $0x10] sm:$0xf]
      %v206 = vld [vmem:[%s195 + $0x14] sm:$0xf]
      %v207 = vld [vmem:[%s195 + $0x18] sm:$0xf]
      %v208 = vld [vmem:[%s195 + $0x1c] sm:$0xf]
      %v209 = vld [vmem:[%s195 + $0x20] sm:$0xf]
      %v210 = vld [vmem:[%s195 + $0x24] sm:$0xf]
      %v211 = vld [vmem:[%s195 + $0x28] sm:$0xf]
      %v212 = vld [vmem:[%s195 + $0x2c] sm:$0xf]
      %v213 = vld [vmem:[%s195 + $0x30] sm:$0xf]
      %v214 = vld [vmem:[%s195 + $0x34] sm:$0xf]
      %v215 = vld [vmem:[%s195 + $0x38] sm:$0xf]
      %v216 = vld [vmem:[%s195 + $0x3c] sm:$0xf]
      %v217 = vld [vmem:[%s195 + $0x40] sm:$0xf]
      %v218 = vld [vmem:[%s195 + $0x44] sm:$0xf]
      %v219 = vld [vmem:[%s195 + $0x48] sm:$0xf]
      %v220 = vld [vmem:[%s195 + $0x4c] sm:$0xf]
      %v221 = vld [vmem:[%s195 + $0x50] sm:$0xf]
      %v222 = vld [vmem:[%s195 + $0x54] sm:$0xf]
      %v223 = vld [vmem:[%s195 + $0x58] sm:$0xf]
      %v224 = vld [vmem:[%s195 + $0x5c] sm:$0xf]
      %v225 = vld [vmem:[%s195 + $0x60] sm:$0xf]
      %v226 = vld [vmem:[%s195 + $0x64] sm:$0xf]
      %v227 = vld [vmem:[%s195 + $0x68] sm:$0xf]
      %v228 = vld [vmem:[%s195 + $0x6c] sm:$0xf]
      %v229 = vld [vmem:[%s195 + $0x70] sm:$0xf]
      %v230 = vld [vmem:[%s195 + $0x74] sm:$0xf]
      %v231 = vld [vmem:[%s195 + $0x78] sm:$0xf]
      %v232 = vld [vmem:[%s195 + $0x7c] sm:$0xf]
      %v233 = vunpack.c.l.bf16 %v201
      %v234 = vunpack.c.l.bf16 %v202
      %v235 = vunpack.c.l.bf16 %v203
      %v236 = vunpack.c.l.bf16 %v204
      %v237 = vunpack.c.l.bf16 %v205
      %v238 = vunpack.c.l.bf16 %v206
      %v239 = vunpack.c.l.bf16 %v207
      %v240 = vunpack.c.l.bf16 %v208
      %v241 = vunpack.c.l.bf16 %v209
      %v242 = vunpack.c.l.bf16 %v210
      %v243 = vunpack.c.l.bf16 %v211
      %v244 = vunpack.c.l.bf16 %v212
      %v245 = vunpack.c.l.bf16 %v213
      %v246 = vunpack.c.l.bf16 %v214
      %v247 = vunpack.c.l.bf16 %v215
      %v248 = vunpack.c.l.bf16 %v216
      %v249 = vunpack.c.l.bf16 %v217
      %v250 = vunpack.c.l.bf16 %v218
      %v251 = vunpack.c.l.bf16 %v219
      %v252 = vunpack.c.l.bf16 %v220
      %v253 = vunpack.c.l.bf16 %v221
      %v254 = vunpack.c.l.bf16 %v222
      %v255 = vunpack.c.l.bf16 %v223
      %v256 = vunpack.c.l.bf16 %v224
      %v257 = vunpack.c.l.bf16 %v225
      %v258 = vunpack.c.l.bf16 %v226
      %v259 = vunpack.c.l.bf16 %v227
      %v260 = vunpack.c.l.bf16 %v228
      %v261 = vunpack.c.l.bf16 %v229
      %v262 = vunpack.c.l.bf16 %v230
      %v263 = vunpack.c.l.bf16 %v231
      %v264 = vunpack.c.l.bf16 %v232
      %v265 = vadd.f32 %v233, %v234
      %v266 = vadd.f32 %v265, %v235
      %v267 = vadd.f32 %v266, %v236
      %v268 = vadd.f32 %v267, %v237
      %v269 = vadd.f32 %v268, %v238
      %v270 = vadd.f32 %v269, %v239
      %v271 = vadd.f32 %v270, %v240
      %v272 = vadd.f32 %v271, %v241
      %v273 = vadd.f32 %v272, %v242
      %v274 = vadd.f32 %v273, %v243
      %v275 = vadd.f32 %v274, %v244
      %v276 = vadd.f32 %v275, %v245
      %v277 = vadd.f32 %v276, %v246
      %v278 = vadd.f32 %v277, %v247
      %v279 = vadd.f32 %v278, %v248
      %v280 = vrot.slane %v279, 4
      %v281 = vadd.f32 %v279, %v280
      %v282 = vrot.slane %v281, 2
      %v283 = vadd.f32 %v281, %v282
      %v284 = vrot.slane %v283, 1
      %v285 = vadd.f32 %v283, %v284
      %v286 = vadd.f32 %v249, %v250
      %v287 = vadd.f32 %v286, %v251
      %v288 = vadd.f32 %v287, %v252
      %v289 = vadd.f32 %v288, %v253
      %v290 = vadd.f32 %v289, %v254
      %v291 = vadd.f32 %v290, %v255
      %v292 = vadd.f32 %v291, %v256
      %v293 = vadd.f32 %v292, %v257
      %v294 = vadd.f32 %v293, %v258
      %v295 = vadd.f32 %v294, %v259
      %v296 = vadd.f32 %v295, %v260
      %v297 = vadd.f32 %v296, %v261
      %v298 = vadd.f32 %v297, %v262
      %v299 = vadd.f32 %v298, %v263
      %v300 = vadd.f32 %v299, %v264
      %v301 = vrot.slane %v300, 4
      %v302 = vadd.f32 %v300, %v301
      %v303 = vrot.slane %v302, 2
      %v304 = vadd.f32 %v302, %v303
      %v305 = vrot.slane %v304, 1
      %v306 = vadd.f32 %v304, %v305
      %309 = vrot.lane.b32.xlu0 %v285, 64
      %v310 = vpop.permute.xlu0 %309
      %311 = vrot.lane.b32.xlu0 %v306, 64
      %v312 = vpop.permute.xlu0 %311
      %v315 = vadd.f32 %v285, %v310
      %v316 = vadd.f32 %v306, %v312
      %v317 = vmul.f32 %v315, 0.00390625
      %v318 = vmul.f32 %v316, 0.00390625
      %v319 = vld [vmem:[%s1] sm:$0xff]
      %v320 = vld [vmem:[%s1 + $0x8] sm:$0xff]
      %v321 = vld [vmem:[%s1 + $0x10] sm:$0xff]
      %v322 = vld [vmem:[%s1 + $0x18] sm:$0xff]
      %v323 = vld [vmem:[%s1 + $0x20] sm:$0xff]
      %v324 = vld [vmem:[%s1 + $0x28] sm:$0xff]
      %v325 = vld [vmem:[%s1 + $0x30] sm:$0xff]
      %v326 = vld [vmem:[%s1 + $0x38] sm:$0xff]
      %v327 = vld [vmem:[%s2] sm:$0xff]
      %v328 = vld [vmem:[%s2 + $0x8] sm:$0xff]
      %v329 = vld [vmem:[%s2 + $0x10] sm:$0xff]
      %v330 = vld [vmem:[%s2 + $0x18] sm:$0xff]
      %v331 = vld [vmem:[%s2 + $0x20] sm:$0xff]
      %v332 = vld [vmem:[%s2 + $0x28] sm:$0xff]
      %v333 = vld [vmem:[%s2 + $0x30] sm:$0xff]
      %v334 = vld [vmem:[%s2 + $0x38] sm:$0xff]
      %v335 = vld [vmem:[%s3] sm:$0x1]
      %v338 = vrot.slane %v318, 7
      %vm339 = vcmask 1041409
      %v340 = vsel %vm339, %v338, %v317
      %vm341 = vcmask 523264
      %v342 = vsel %vm341, %v340, 0
      %344 = vmatprep.subr.mxu0 0.0
      %345 = vmatpush1.msra.mxu0 0.0
      %346 = vmatprep.subr.mxu0 0.0
      %347 = vmatpush1.msra.mxu0 0.0
      %348 = vmatprep.subr.mxu0 0.0
      %349 = vmatpush1.msra.mxu0 0.0
      %350 = vmatprep.subr.mxu0 0.0
      %351 = vmatpush1.msra.mxu0 0.0
      %352 = vmatprep.subr.mxu0 0.0
      %353 = vmatpush1.msra.mxu0 0.0
      %354 = vmatprep.subr.mxu0 0.0
      %355 = vmatpush1.msra.mxu0 0.0
      %356 = vmatprep.subr.mxu0 0.0
      %357 = vmatpush1.msra.mxu0 0.0
      %358 = vmatprep.subr.mxu0 0.0
      %359 = vmatpush1.msra.mxu0 0.0
      %360 = vmatprep.subr.mxu0 0.0
      %361 = vmatpush1.msra.mxu0 %v326
      %362 = vmatprep.subr.mxu0 0.0
      %363 = vmatpush1.msra.mxu0 %v325
      %364 = vmatprep.subr.mxu0 0.0
      %365 = vmatpush1.msra.mxu0 %v324
      %366 = vmatprep.subr.mxu0 0.0
      %367 = vmatpush1.msra.mxu0 %v323
      %368 = vmatprep.subr.mxu0 0.0
      %369 = vmatpush1.msra.mxu0 %v322
      %370 = vmatprep.subr.mxu0 0.0
      %371 = vmatpush1.msra.mxu0 %v321
      %372 = vmatprep.subr.mxu0 0.0
      %373 = vmatpush1.msra.mxu0 %v320
      %374 = vmatprep.subr.mxu0 0.0
      %375 = vmatpush1.msra.mxu0 %v319
      %376 = vmatprep.subr.mxu0 0.0
      %377 = vmatpush2.msra.mxu0 0.0
      %378 = vmatprep.subr.mxu0 0.0
      %379 = vmatpush2.msra.mxu0 0.0
      %380 = vmatprep.subr.mxu0 0.0
      %381 = vmatpush2.msra.mxu0 0.0
      %382 = vmatprep.subr.mxu0 0.0
      %383 = vmatpush2.msra.mxu0 0.0
      %384 = vmatprep.subr.mxu0 0.0
      %385 = vmatpush2.msra.mxu0 0.0
      %386 = vmatprep.subr.mxu0 0.0
      %387 = vmatpush2.msra.mxu0 0.0
      %388 = vmatprep.subr.mxu0 0.0
      %389 = vmatpush2.msra.mxu0 0.0
      %390 = vmatprep.subr.mxu0 0.0
      %391 = vmatpush2.msra.mxu0 0.0
      %392 = vmatprep.subr.mxu0 0.0
      %393 = vmatpush2.msra.mxu0 0.0
      %394 = vmatprep.subr.mxu0 0.0
      %395 = vmatpush2.msra.mxu0 0.0
      %396 = vmatprep.subr.mxu0 0.0
      %397 = vmatpush2.msra.mxu0 0.0
      %398 = vmatprep.subr.mxu0 0.0
      %399 = vmatpush2.msra.mxu0 0.0
      %400 = vmatprep.subr.mxu0 0.0
      %401 = vmatpush2.msra.mxu0 0.0
      %402 = vmatprep.subr.mxu0 0.0
      %403 = vmatpush2.msra.mxu0 0.0
      %404 = vmatprep.subr.mxu0 0.0
      %405 = vmatpush2.msra.mxu0 0.0
      %406 = vmatprep.subr.mxu0 0.0
      %407 = vmatpush2.msra.mxu0 0.0
      %408 = vmatprep.mubr.f32.mxu0 0.0
      %409 = vmatmul.mubr.f32.gmra.mxu0 %v342
      %v410 = vpop.f32.mrf.mxu0
      %v411 = vadd.f32 0.0, %v410
      %v412 = vpop.f32.mrf.mxu0
      %413 = vdwg.mxu0
      %vm414 = vcmp.gt.f32.partialorder %v411, 0.0
      %v415 = vmul.f32 %v411, 0.01
      %v416 = vsel %vm414, %v411, %v415
      %v418 = vlaneseq
      %v419 = vshrl.u32 %v418, 7
      %v420 = vsub.s32 0, %v419
      %v421 = vrot.slane %v335, %v420
      %v424 = vsel %vm341, %v416, 0
      %426 = vmatprep.subr.mxu0 0.0
      %427 = vmatpush1.msra.mxu0 0.0
      %428 = vmatprep.subr.mxu0 0.0
      %429 = vmatpush1.msra.mxu0 0.0
      %430 = vmatprep.subr.mxu0 0.0
      %431 = vmatpush1.msra.mxu0 0.0
      %432 = vmatprep.subr.mxu0 0.0
      %433 = vmatpush1.msra.mxu0 0.0
      %434 = vmatprep.subr.mxu0 0.0
      %435 = vmatpush1.msra.mxu0 0.0
      %436 = vmatprep.subr.mxu0 0.0
      %437 = vmatpush1.msra.mxu0 0.0
      %438 = vmatprep.subr.mxu0 0.0
      %439 = vmatpush1.msra.mxu0 0.0
      %440 = vmatprep.subr.mxu0 0.0
      %441 = vmatpush1.msra.mxu0 0.0
      %442 = vmatprep.subr.mxu0 0.0
      %443 = vmatpush1.msra.mxu0 %v334
      %444 = vmatprep.subr.mxu0 0.0
      %445 = vmatpush1.msra.mxu0 %v333
      %446 = vmatprep.subr.mxu0 0.0
      %447 = vmatpush1.msra.mxu0 %v332
      %448 = vmatprep.subr.mxu0 0.0
      %449 = vmatpush1.msra.mxu0 %v331
      %450 = vmatprep.subr.mxu0 0.0
      %451 = vmatpush1.msra.mxu0 %v330
      %452 = vmatprep.subr.mxu0 0.0
      %453 = vmatpush1.msra.mxu0 %v329
      %454 = vmatprep.subr.mxu0 0.0
      %455 = vmatpush1.msra.mxu0 %v328
      %456 = vmatprep.subr.mxu0 0.0
      %457 = vmatpush1.msra.mxu0 %v327
      %458 = vmatprep.subr.mxu0 0.0
      %459 = vmatpush2.msra.mxu0 0.0
      %460 = vmatprep.subr.mxu0 0.0
      %461 = vmatpush2.msra.mxu0 0.0
      %462 = vmatprep.subr.mxu0 0.0
      %463 = vmatpush2.msra.mxu0 0.0
      %464 = vmatprep.subr.mxu0 0.0
      %465 = vmatpush2.msra.mxu0 0.0
      %466 = vmatprep.subr.mxu0 0.0
      %467 = vmatpush2.msra.mxu0 0.0
      %468 = vmatprep.subr.mxu0 0.0
      %469 = vmatpush2.msra.mxu0 0.0
      %470 = vmatprep.subr.mxu0 0.0
      %471 = vmatpush2.msra.mxu0 0.0
      %472 = vmatprep.subr.mxu0 0.0
      %473 = vmatpush2.msra.mxu0 0.0
      %474 = vmatprep.subr.mxu0 0.0
      %475 = vmatpush2.msra.mxu0 0.0
      %476 = vmatprep.subr.mxu0 0.0
      %477 = vmatpush2.msra.mxu0 0.0
      %478 = vmatprep.subr.mxu0 0.0
      %479 = vmatpush2.msra.mxu0 0.0
      %480 = vmatprep.subr.mxu0 0.0
      %481 = vmatpush2.msra.mxu0 0.0
      %482 = vmatprep.subr.mxu0 0.0
      %483 = vmatpush2.msra.mxu0 0.0
      %484 = vmatprep.subr.mxu0 0.0
      %485 = vmatpush2.msra.mxu0 0.0
      %486 = vmatprep.subr.mxu0 0.0
      %487 = vmatpush2.msra.mxu0 0.0
      %488 = vmatprep.subr.mxu0 0.0
      %489 = vmatpush2.msra.mxu0 0.0
      %490 = vmatprep.mubr.f32.mxu0 0.0
      %491 = vmatmul.mubr.f32.gmra.mxu0 %v424
      %v492 = vpop.f32.mrf.mxu0
      %v493 = vadd.f32 %v421, %v492
      %v494 = vpop.f32.mrf.mxu0
      %495 = vdwg.mxu0
      %vm496 = vcmask 517120
      %497 = vst.msk [vmem:[%s200] sm:$0x3] %vm496, %v493
      %498 = vrot.lane.b32.xlu0 %v340, 64
      %v499 = vpop.permute.xlu0 %498
      %vm501 = vcmask 1041920
      %502 = vst.msk [vmem:[%s200] sm:$0x3] %vm501, %v499
      %p503 = scmp.lt.s32.totalorder %s15, 1
      %s504 = scalar_select %p503, %s15, 1
      %s505 = smul.addr %s504, 2
      %s506 = scalar_lea.vmem %s4, %s505
      // Predicated region
      $region37: #{simsiam_forward.3} parent=35 // pred_check
        %p507 = pneg %p122
      $region38: #{simsiam_forward.3} parent=35 // pred_check_branch
        %509 = sbr.rel (%p507) target = $region40
      $region39: #{simsiam_forward.3} parent=35 // pred_region
        _
      $region40: #{simsiam_forward.3} parent=35 // pred_fallthru
        _
    $region36: #{simsiam_forward.3} parent=5 // pred_fallthru
      _
    %p510 = scmp.le.s32.totalorder 2, %s10
    // Predicated region
    $region41: #{simsiam_forward.3} parent=5 // pred_check
      %p511 = pneg %p510
    $region42: #{simsiam_forward.3} parent=5 // pred_check_branch
      %513 = sbr.rel (%p511) target = $region44
    $region43: #{simsiam_forward.3} parent=5 // pred_region
      %s514 = ssub.s32 %s10, 2
      // Predicated region
      $region45: #{simsiam_forward.3} parent=43 // pred_check
        %p515 = pneg %p128
      $region46: #{simsiam_forward.3} parent=43 // pred_check_branch
        %517 = sbr.rel (%p515) target = $region48
      $region47: #{simsiam_forward.3} parent=43 // pred_region
        %p518 = scmp.lt.s32.totalorder %s16, 1
        %s519 = scalar_select %p518, %s16, 1
        %s520 = smul.addr %s519, 2
        %s521 = scalar_lea.vmem %s4, %s520
      $region48: #{simsiam_forward.3} parent=43 // pred_fallthru
        _
    $region44: #{simsiam_forward.3} parent=5 // pred_fallthru
      _
  $region6: #{simsiam_forward.3} parent=0 // loop_footer
    %s14 = sadd.s32 1, %s10
  $region7: #{simsiam_forward.3} parent=0 // loop_footer_branch
    %9 = sbr.rel target = $region3
  $region8: #{simsiam_forward.3} parent=0 // loop_exit
    _

</llo_original>
